<compile_context>
chip_gen: v7x
topology: tpu7x:2x2x1
jax: 0.10.0
libtpu: 0.0.40
codegen_flags: <defaults>
</compile_context>

<pallas_src>
import functools

import jax
import jax.numpy as jnp
import numpy as np
from jax import lax
from jax.experimental import pallas as pl
from jax.experimental.pallas import tpu as pltpu


# ------------------------- fixed (toy) problem sizes -------------------------
_H, _W, _CIN = 16, 16, 4          # input spatial / channels
_C1, _C2 = 16, 32                 # conv1 / conv2 output channels
_H2, _W2 = _H // 2, _W // 2       # after pool1
_H3, _W3 = _H2 // 2, _W2 // 2     # after pool2


# ------------------------------- Pallas kernel -------------------------------

def _alex_bottom_kernel(x_ref, a1_ref, b1_ref, s_ref, r_ref,
                        a2_ref, b2_ref, t_ref, q_ref, o_ref):
    f32 = jnp.float32
    x = x_ref[...]                                        # (H+2, (W+2)*CIN) = (18, 72)

    # conv1 (3x3, pad=1) + bias + ReLU  ->  (H, W*C1) = (16, 256)
    h1 = b1_ref[...]                                      # (1, 256) broadcast = bias init
    for ki in range(3):                                   # banded matmul per row tap
        h1 = h1 + jnp.dot(x[ki:ki + _H, :], a1_ref[ki],
                          preferred_element_type=f32)
    h1 = jnp.maximum(h1, 0.0)

    # maxpool 2x2 + zero-pad for conv2  ->  (H2+2, (W2+2)*C1) = (10, 160)
    u = jnp.maximum(jnp.dot(h1, s_ref[0], preferred_element_type=f32),
                    jnp.dot(h1, s_ref[1], preferred_element_type=f32))
    p1 = jnp.maximum(jnp.dot(r_ref[0], u, preferred_element_type=f32),
                     jnp.dot(r_ref[1], u, preferred_element_type=f32))

    # conv2 (3x3, pad=1) + bias + ReLU  ->  (H2, W2*C2) = (8, 256)
    h2 = b2_ref[...]                                      # (1, 256)
    for ki in range(3):
        h2 = h2 + jnp.dot(p1[ki:ki + _H2, :], a2_ref[ki],
                          preferred_element_type=f32)
    h2 = jnp.maximum(h2, 0.0)

    # maxpool 2x2  ->  (H3, W3*C2) = (4, 128)   (lane-dense final store)
    v = jnp.maximum(jnp.dot(h2, t_ref[0], preferred_element_type=f32),
                    jnp.dot(h2, t_ref[1], preferred_element_type=f32))
    o_ref[...] = jnp.maximum(
        jnp.dot(q_ref[0], v, preferred_element_type=f32),
        jnp.dot(q_ref[1], v, preferred_element_type=f32)).astype(o_ref.dtype)


# ------------------- one-time parameter layout preprocessing ------------------

def pack_params(params):
    """Expand PyTorch-layout conv weights into banded matmul weights and build
    the constant 0/1 pooling selection matrices (setup-time, numpy)."""
    w1 = np.asarray(params["w1"], np.float32)   # (C1, CIN, 3, 3)
    b1 = np.asarray(params["b1"], np.float32)   # (C1,)
    w2 = np.asarray(params["w2"], np.float32)   # (C2, C1, 3, 3)
    b2 = np.asarray(params["b2"], np.float32)   # (C2,)

    # conv1: A1[ki][(ow+kj)*CIN + c, ow*C1 + oc] = w1[oc, c, ki, kj]
    A1 = np.zeros((3, (_W + 2) * _CIN, _W * _C1), np.float32)
    for ki in range(3):
        for kj in range(3):
            blk = w1[:, :, ki, kj].T            # (CIN, C1)
            for ow in range(_W):
                A1[ki, (ow + kj) * _CIN:(ow + kj + 1) * _CIN,
                   ow * _C1:(ow + 1) * _C1] = blk
    b1r = np.tile(b1, _W).reshape(1, _W * _C1)

    # pool1 width-select (+ width zero-pad for conv2):  (16, 256) -> (16, 160)
    S = np.zeros((2, _W * _C1, (_W2 + 2) * _C1), np.float32)
    for e in range(2):
        for ow2 in range(_W2):
            for oc in range(_C1):
                S[e, (2 * ow2 + e) * _C1 + oc, (ow2 + 1) * _C1 + oc] = 1.0
    # pool1 height-select (+ height zero-pad for conv2): (16, 160) -> (10, 160)
    R = np.zeros((2, _H2 + 2, _H), np.float32)
    for e in range(2):
        for r in range(_H2):
            R[e, r + 1, 2 * r + e] = 1.0

    # conv2: A2[ki][(ow+kj)*C1 + ic, ow*C2 + oc] = w2[oc, ic, ki, kj]
    A2 = np.zeros((3, (_W2 + 2) * _C1, _W2 * _C2), np.float32)
    for ki in range(3):
        for kj in range(3):
            blk = w2[:, :, ki, kj].T            # (C1, C2)
            for ow in range(_W2):
                A2[ki, (ow + kj) * _C1:(ow + kj + 1) * _C1,
                   ow * _C2:(ow + 1) * _C2] = blk
    b2r = np.tile(b2, _W2).reshape(1, _W2 * _C2)

    # pool2 selection matrices (no padding): (8, 256) -> (4, 128)
    T = np.zeros((2, _W2 * _C2, _W3 * _C2), np.float32)
    for e in range(2):
        for ow3 in range(_W3):
            for oc in range(_C2):
                T[e, (2 * ow3 + e) * _C2 + oc, ow3 * _C2 + oc] = 1.0
    Q = np.zeros((2, _H3, _H2), np.float32)
    for e in range(2):
        for r in range(_H3):
            Q[e, r, 2 * r + e] = 1.0

    packed = dict(A1=A1, b1r=b1r, S=S, R=R, A2=A2, b2r=b2r, T=T, Q=Q)
    return {k: jnp.asarray(v) for k, v in packed.items()}


# ------------------------------ JAX-level wrapper -----------------------------

def alex_bottom_forward(x_nchw, packed):
    """Forward pass of the (mini) AlexBottom feature stack. NCHW in / out."""
    B = x_nchw.shape[0]
    x = jnp.transpose(x_nchw, (0, 2, 3, 1))                # NCHW -> NHWC
    x = jnp.pad(x, ((0, 0), (1, 1), (1, 1), (0, 0)))       # spatial zero pad
    x2 = x.reshape(B, _H + 2, (_W + 2) * _CIN)             # (B, 18, 72)

    def const_spec(shape):
        return pl.BlockSpec(shape, lambda b: (0,) * len(shape))

    out = pl.pallas_call(
        _alex_bottom_kernel,
        out_shape=jax.ShapeDtypeStruct((B, _H3, _W3 * _C2), jnp.float32),
        grid=(B,),
        in_specs=[
            pl.BlockSpec((None, _H + 2, (_W + 2) * _CIN), lambda b: (b, 0, 0)),
            const_spec(packed["A1"].shape),
            const_spec(packed["b1r"].shape),
            const_spec(packed["S"].shape),
            const_spec(packed["R"].shape),
            const_spec(packed["A2"].shape),
            const_spec(packed["b2r"].shape),
            const_spec(packed["T"].shape),
            const_spec(packed["Q"].shape),
        ],
        out_specs=pl.BlockSpec((None, _H3, _W3 * _C2), lambda b: (b, 0, 0)),
        compiler_params=pltpu.CompilerParams(
            dimension_semantics=("parallel",)),
    )(x2, packed["A1"], packed["b1r"], packed["S"], packed["R"],
      packed["A2"], packed["b2r"], packed["T"], packed["Q"])

    out = out.reshape(B, _H3, _W3, _C2)                    # NHWC
    return jnp.transpose(out, (0, 3, 1, 2))                # NHWC -> NCHW


# --------------------------- reference (pure JAX) ----------------------------

def _ref_forward(x_nchw, params):
    def conv(x, w, b):
        y = lax.conv_general_dilated(
            x, w, window_strides=(1, 1), padding=((1, 1), (1, 1)),
            dimension_numbers=("NCHW", "OIHW", "NCHW"))
        return jnp.maximum(y + b.reshape(1, -1, 1, 1), 0.0)

    def pool(x):
        return lax.reduce_window(
            x, -jnp.inf, lax.max,
            window_dimensions=(1, 1, 2, 2), window_strides=(1, 1, 2, 2),
            padding="VALID")

    x = pool(conv(x_nchw, params["w1"], params["b1"]))
    x = pool(conv(x, params["w2"], params["b2"]))
    return x


# ---------------------------------- main -------------------------------------

if __name__ == "__main__":
    key = jax.random.PRNGKey(0)
    k_x, k_w1, k_b1, k_w2, k_b2 = jax.random.split(key, 5)

    B = 2
    x = jax.random.normal(k_x, (B, _CIN, _H, _W), dtype=jnp.float32)
    params = {
        "w1": 0.1 * jax.random.normal(k_w1, (_C1, _CIN, 3, 3), dtype=jnp.float32),
        "b1": 0.1 * jax.random.normal(k_b1, (_C1,), dtype=jnp.float32),
        "w2": 0.1 * jax.random.normal(k_w2, (_C2, _C1, 3, 3), dtype=jnp.float32),
        "b2": 0.1 * jax.random.normal(k_b2, (_C2,), dtype=jnp.float32),
    }

    packed = pack_params(params)          # one-time weight layout preprocessing
    fwd = jax.jit(functools.partial(alex_bottom_forward, packed=packed))

    out = jax.block_until_ready(fwd(x))
    assert out.shape == (B, _C2, _H // 4, _W // 4), out.shape

    ref = jax.block_until_ready(_ref_forward(x, params))
    np.testing.assert_allclose(np.asarray(out), np.asarray(ref),
                               rtol=2e-5, atol=2e-5)

    print("KERNEL_OK")
</pallas_src>

<mosaic_0001>
module attributes {stable_mosaic.version = 11 : i64} {
  func.func @_alex_bottom_kernel(%arg0: i32, %arg1: memref<1x18x72xf32, #tpu.memory_space<vmem>>, %arg2: memref<3x72x256xf32, #tpu.memory_space<vmem>>, %arg3: memref<1x256xf32, #tpu.memory_space<vmem>>, %arg4: memref<2x256x160xf32, #tpu.memory_space<vmem>>, %arg5: memref<2x10x16xf32, #tpu.memory_space<vmem>>, %arg6: memref<3x160x256xf32, #tpu.memory_space<vmem>>, %arg7: memref<1x256xf32, #tpu.memory_space<vmem>>, %arg8: memref<2x256x128xf32, #tpu.memory_space<vmem>>, %arg9: memref<2x4x8xf32, #tpu.memory_space<vmem>>, %arg10: memref<1x4x128xf32, #tpu.memory_space<vmem>>) attributes {dimension_semantics = [#tpu.dimension_semantics<parallel>], iteration_bounds = array<i64: 2>, scalar_prefetch = 0 : i64, scratch_operands = 0 : i64, tpu.core_type = #tpu.core_type<tc>, window_params = [{transform_indices = @transform_0, window_bounds = array<i64: 1, 18, 72>}, {pipeline_mode = #tpu.pipeline_mode<synchronous>, transform_indices = @transform_1, window_bounds = array<i64: 3, 72, 256>}, {pipeline_mode = #tpu.pipeline_mode<synchronous>, transform_indices = @transform_2, window_bounds = array<i64: 1, 256>}, {pipeline_mode = #tpu.pipeline_mode<synchronous>, transform_indices = @transform_3, window_bounds = array<i64: 2, 256, 160>}, {pipeline_mode = #tpu.pipeline_mode<synchronous>, transform_indices = @transform_4, window_bounds = array<i64: 2, 10, 16>}, {pipeline_mode = #tpu.pipeline_mode<synchronous>, transform_indices = @transform_5, window_bounds = array<i64: 3, 160, 256>}, {pipeline_mode = #tpu.pipeline_mode<synchronous>, transform_indices = @transform_6, window_bounds = array<i64: 1, 256>}, {pipeline_mode = #tpu.pipeline_mode<synchronous>, transform_indices = @transform_7, window_bounds = array<i64: 2, 256, 128>}, {pipeline_mode = #tpu.pipeline_mode<synchronous>, transform_indices = @transform_8, window_bounds = array<i64: 2, 4, 8>}, {transform_indices = @transform_9, window_bounds = array<i64: 1, 4, 128>}]} {
    %c0 = arith.constant 0 : index
    %c0_0 = arith.constant 0 : index
    %c0_1 = arith.constant 0 : index
    %0 = vector.load %arg1[%c0, %c0_0, %c0_1] : memref<1x18x72xf32, #tpu.memory_space<vmem>>, vector<1x18x72xf32>
    %1 = vector.shape_cast %0 : vector<1x18x72xf32> to vector<18x72xf32>
    %c0_2 = arith.constant 0 : index
    %c0_3 = arith.constant 0 : index
    %2 = vector.load %arg3[%c0_2, %c0_3] : memref<1x256xf32, #tpu.memory_space<vmem>>, vector<1x256xf32>
    %3 = vector.extract_strided_slice %1 {offsets = [0, 0], sizes = [16, 72], strides = [1, 1]} : vector<18x72xf32> to vector<16x72xf32>
    %c0_4 = arith.constant 0 : index
    %c0_5 = arith.constant 0 : index
    %c0_6 = arith.constant 0 : index
    %4 = vector.load %arg2[%c0_4, %c0_5, %c0_6] : memref<3x72x256xf32, #tpu.memory_space<vmem>>, vector<1x72x256xf32>
    %5 = vector.shape_cast %4 : vector<1x72x256xf32> to vector<72x256xf32>
    %cst = arith.constant dense<0.000000e+00> : vector<16x256xf32>
    %6 = tpu.matmul %3, %5, %cst {dimension_numbers = #tpu.dot_dimension_numbers<[1], [0], [0], [1], [0, 0, 1, 1], [], []>} : vector<16x72xf32>, vector<72x256xf32>, vector<16x256xf32> -> vector<16x256xf32>
    %7 = vector.broadcast %2 : vector<1x256xf32> to vector<16x256xf32>
    %8 = arith.addf %7, %6 : vector<16x256xf32>
    %9 = vector.extract_strided_slice %1 {offsets = [1, 0], sizes = [16, 72], strides = [1, 1]} : vector<18x72xf32> to vector<16x72xf32>
    %c1 = arith.constant 1 : index
    %c0_7 = arith.constant 0 : index
    %c0_8 = arith.constant 0 : index
    %10 = vector.load %arg2[%c1, %c0_7, %c0_8] : memref<3x72x256xf32, #tpu.memory_space<vmem>>, vector<1x72x256xf32>
    %11 = vector.shape_cast %10 : vector<1x72x256xf32> to vector<72x256xf32>
    %cst_9 = arith.constant dense<0.000000e+00> : vector<16x256xf32>
    %12 = tpu.matmul %9, %11, %cst_9 {dimension_numbers = #tpu.dot_dimension_numbers<[1], [0], [0], [1], [0, 0, 1, 1], [], []>} : vector<16x72xf32>, vector<72x256xf32>, vector<16x256xf32> -> vector<16x256xf32>
    %13 = arith.addf %8, %12 : vector<16x256xf32>
    %14 = vector.extract_strided_slice %1 {offsets = [2, 0], sizes = [16, 72], strides = [1, 1]} : vector<18x72xf32> to vector<16x72xf32>
    %c2 = arith.constant 2 : index
    %c0_10 = arith.constant 0 : index
    %c0_11 = arith.constant 0 : index
    %15 = vector.load %arg2[%c2, %c0_10, %c0_11] : memref<3x72x256xf32, #tpu.memory_space<vmem>>, vector<1x72x256xf32>
    %16 = vector.shape_cast %15 : vector<1x72x256xf32> to vector<72x256xf32>
    %cst_12 = arith.constant dense<0.000000e+00> : vector<16x256xf32>
    %17 = tpu.matmul %14, %16, %cst_12 {dimension_numbers = #tpu.dot_dimension_numbers<[1], [0], [0], [1], [0, 0, 1, 1], [], []>} : vector<16x72xf32>, vector<72x256xf32>, vector<16x256xf32> -> vector<16x256xf32>
    %18 = arith.addf %13, %17 : vector<16x256xf32>
    %cst_13 = arith.constant 0.000000e+00 : f32
    %19 = vector.broadcast %cst_13 : f32 to vector<16x256xf32>
    %20 = arith.maximumf %18, %19 : vector<16x256xf32>
    %c0_14 = arith.constant 0 : index
    %c0_15 = arith.constant 0 : index
    %c0_16 = arith.constant 0 : index
    %21 = vector.load %arg4[%c0_14, %c0_15, %c0_16] : memref<2x256x160xf32, #tpu.memory_space<vmem>>, vector<1x256x160xf32>
    %22 = vector.shape_cast %21 : vector<1x256x160xf32> to vector<256x160xf32>
    %cst_17 = arith.constant dense<0.000000e+00> : vector<16x160xf32>
    %23 = tpu.matmul %20, %22, %cst_17 {dimension_numbers = #tpu.dot_dimension_numbers<[1], [0], [0], [1], [0, 0, 1, 1], [], []>} : vector<16x256xf32>, vector<256x160xf32>, vector<16x160xf32> -> vector<16x160xf32>
    %c1_18 = arith.constant 1 : index
    %c0_19 = arith.constant 0 : index
    %c0_20 = arith.constant 0 : index
    %24 = vector.load %arg4[%c1_18, %c0_19, %c0_20] : memref<2x256x160xf32, #tpu.memory_space<vmem>>, vector<1x256x160xf32>
    %25 = vector.shape_cast %24 : vector<1x256x160xf32> to vector<256x160xf32>
    %cst_21 = arith.constant dense<0.000000e+00> : vector<16x160xf32>
    %26 = tpu.matmul %20, %25, %cst_21 {dimension_numbers = #tpu.dot_dimension_numbers<[1], [0], [0], [1], [0, 0, 1, 1], [], []>} : vector<16x256xf32>, vector<256x160xf32>, vector<16x160xf32> -> vector<16x160xf32>
    %27 = arith.maximumf %23, %26 : vector<16x160xf32>
    %c0_22 = arith.constant 0 : index
    %c0_23 = arith.constant 0 : index
    %c0_24 = arith.constant 0 : index
    %28 = vector.load %arg5[%c0_22, %c0_23, %c0_24] : memref<2x10x16xf32, #tpu.memory_space<vmem>>, vector<1x10x16xf32>
    %29 = vector.shape_cast %28 : vector<1x10x16xf32> to vector<10x16xf32>
    %cst_25 = arith.constant dense<0.000000e+00> : vector<10x160xf32>
    %30 = tpu.matmul %29, %27, %cst_25 {dimension_numbers = #tpu.dot_dimension_numbers<[1], [0], [0], [1], [0, 0, 1, 1], [], []>} : vector<10x16xf32>, vector<16x160xf32>, vector<10x160xf32> -> vector<10x160xf32>
    %c1_26 = arith.constant 1 : index
    %c0_27 = arith.constant 0 : index
    %c0_28 = arith.constant 0 : index
    %31 = vector.load %arg5[%c1_26, %c0_27, %c0_28] : memref<2x10x16xf32, #tpu.memory_space<vmem>>, vector<1x10x16xf32>
    %32 = vector.shape_cast %31 : vector<1x10x16xf32> to vector<10x16xf32>
    %cst_29 = arith.constant dense<0.000000e+00> : vector<10x160xf32>
    %33 = tpu.matmul %32, %27, %cst_29 {dimension_numbers = #tpu.dot_dimension_numbers<[1], [0], [0], [1], [0, 0, 1, 1], [], []>} : vector<10x16xf32>, vector<16x160xf32>, vector<10x160xf32> -> vector<10x160xf32>
    %34 = arith.maximumf %30, %33 : vector<10x160xf32>
    %c0_30 = arith.constant 0 : index
    %c0_31 = arith.constant 0 : index
    %35 = vector.load %arg7[%c0_30, %c0_31] : memref<1x256xf32, #tpu.memory_space<vmem>>, vector<1x256xf32>
    %36 = vector.extract_strided_slice %34 {offsets = [0, 0], sizes = [8, 160], strides = [1, 1]} : vector<10x160xf32> to vector<8x160xf32>
    %c0_32 = arith.constant 0 : index
    %c0_33 = arith.constant 0 : index
    %c0_34 = arith.constant 0 : index
    %37 = vector.load %arg6[%c0_32, %c0_33, %c0_34] : memref<3x160x256xf32, #tpu.memory_space<vmem>>, vector<1x160x256xf32>
    %38 = vector.shape_cast %37 : vector<1x160x256xf32> to vector<160x256xf32>
    %cst_35 = arith.constant dense<0.000000e+00> : vector<8x256xf32>
    %39 = tpu.matmul %36, %38, %cst_35 {dimension_numbers = #tpu.dot_dimension_numbers<[1], [0], [0], [1], [0, 0, 1, 1], [], []>} : vector<8x160xf32>, vector<160x256xf32>, vector<8x256xf32> -> vector<8x256xf32>
    %40 = vector.broadcast %35 : vector<1x256xf32> to vector<8x256xf32>
    %41 = arith.addf %40, %39 : vector<8x256xf32>
    %42 = vector.extract_strided_slice %34 {offsets = [1, 0], sizes = [8, 160], strides = [1, 1]} : vector<10x160xf32> to vector<8x160xf32>
    %c1_36 = arith.constant 1 : index
    %c0_37 = arith.constant 0 : index
    %c0_38 = arith.constant 0 : index
    %43 = vector.load %arg6[%c1_36, %c0_37, %c0_38] : memref<3x160x256xf32, #tpu.memory_space<vmem>>, vector<1x160x256xf32>
    %44 = vector.shape_cast %43 : vector<1x160x256xf32> to vector<160x256xf32>
    %cst_39 = arith.constant dense<0.000000e+00> : vector<8x256xf32>
    %45 = tpu.matmul %42, %44, %cst_39 {dimension_numbers = #tpu.dot_dimension_numbers<[1], [0], [0], [1], [0, 0, 1, 1], [], []>} : vector<8x160xf32>, vector<160x256xf32>, vector<8x256xf32> -> vector<8x256xf32>
    %46 = arith.addf %41, %45 : vector<8x256xf32>
    %47 = vector.extract_strided_slice %34 {offsets = [2, 0], sizes = [8, 160], strides = [1, 1]} : vector<10x160xf32> to vector<8x160xf32>
    %c2_40 = arith.constant 2 : index
    %c0_41 = arith.constant 0 : index
    %c0_42 = arith.constant 0 : index
    %48 = vector.load %arg6[%c2_40, %c0_41, %c0_42] : memref<3x160x256xf32, #tpu.memory_space<vmem>>, vector<1x160x256xf32>
    %49 = vector.shape_cast %48 : vector<1x160x256xf32> to vector<160x256xf32>
    %cst_43 = arith.constant dense<0.000000e+00> : vector<8x256xf32>
    %50 = tpu.matmul %47, %49, %cst_43 {dimension_numbers = #tpu.dot_dimension_numbers<[1], [0], [0], [1], [0, 0, 1, 1], [], []>} : vector<8x160xf32>, vector<160x256xf32>, vector<8x256xf32> -> vector<8x256xf32>
    %51 = arith.addf %46, %50 : vector<8x256xf32>
    %cst_44 = arith.constant 0.000000e+00 : f32
    %52 = vector.broadcast %cst_44 : f32 to vector<8x256xf32>
    %53 = arith.maximumf %51, %52 : vector<8x256xf32>
    %c0_45 = arith.constant 0 : index
    %c0_46 = arith.constant 0 : index
    %c0_47 = arith.constant 0 : index
    %54 = vector.load %arg8[%c0_45, %c0_46, %c0_47] : memref<2x256x128xf32, #tpu.memory_space<vmem>>, vector<1x256x128xf32>
    %55 = vector.shape_cast %54 : vector<1x256x128xf32> to vector<256x128xf32>
    %cst_48 = arith.constant dense<0.000000e+00> : vector<8x128xf32>
    %56 = tpu.matmul %53, %55, %cst_48 {dimension_numbers = #tpu.dot_dimension_numbers<[1], [0], [0], [1], [0, 0, 1, 1], [], []>} : vector<8x256xf32>, vector<256x128xf32>, vector<8x128xf32> -> vector<8x128xf32>
    %c1_49 = arith.constant 1 : index
    %c0_50 = arith.constant 0 : index
    %c0_51 = arith.constant 0 : index
    %57 = vector.load %arg8[%c1_49, %c0_50, %c0_51] : memref<2x256x128xf32, #tpu.memory_space<vmem>>, vector<1x256x128xf32>
    %58 = vector.shape_cast %57 : vector<1x256x128xf32> to vector<256x128xf32>
    %cst_52 = arith.constant dense<0.000000e+00> : vector<8x128xf32>
    %59 = tpu.matmul %53, %58, %cst_52 {dimension_numbers = #tpu.dot_dimension_numbers<[1], [0], [0], [1], [0, 0, 1, 1], [], []>} : vector<8x256xf32>, vector<256x128xf32>, vector<8x128xf32> -> vector<8x128xf32>
    %60 = arith.maximumf %56, %59 : vector<8x128xf32>
    %c0_53 = arith.constant 0 : index
    %c0_54 = arith.constant 0 : index
    %c0_55 = arith.constant 0 : index
    %61 = vector.load %arg9[%c0_53, %c0_54, %c0_55] : memref<2x4x8xf32, #tpu.memory_space<vmem>>, vector<1x4x8xf32>
    %62 = vector.shape_cast %61 : vector<1x4x8xf32> to vector<4x8xf32>
    %cst_56 = arith.constant dense<0.000000e+00> : vector<4x128xf32>
    %63 = tpu.matmul %62, %60, %cst_56 {dimension_numbers = #tpu.dot_dimension_numbers<[1], [0], [0], [1], [0, 0, 1, 1], [], []>} : vector<4x8xf32>, vector<8x128xf32>, vector<4x128xf32> -> vector<4x128xf32>
    %c1_57 = arith.constant 1 : index
    %c0_58 = arith.constant 0 : index
    %c0_59 = arith.constant 0 : index
    %64 = vector.load %arg9[%c1_57, %c0_58, %c0_59] : memref<2x4x8xf32, #tpu.memory_space<vmem>>, vector<1x4x8xf32>
    %65 = vector.shape_cast %64 : vector<1x4x8xf32> to vector<4x8xf32>
    %cst_60 = arith.constant dense<0.000000e+00> : vector<4x128xf32>
    %66 = tpu.matmul %65, %60, %cst_60 {dimension_numbers = #tpu.dot_dimension_numbers<[1], [0], [0], [1], [0, 0, 1, 1], [], []>} : vector<4x8xf32>, vector<8x128xf32>, vector<4x128xf32> -> vector<4x128xf32>
    %67 = arith.maximumf %63, %66 : vector<4x128xf32>
    %c0_61 = arith.constant 0 : index
    %c0_62 = arith.constant 0 : index
    %c0_63 = arith.constant 0 : index
    %68 = vector.load %arg10[%c0_61, %c0_62, %c0_63] : memref<1x4x128xf32, #tpu.memory_space<vmem>>, vector<1x4x128xf32>
    %69 = vector.shape_cast %68 : vector<1x4x128xf32> to vector<4x128xf32>
    %70 = vector.shape_cast %67 : vector<4x128xf32> to vector<1x4x128xf32>
    tpu.vector_store %arg10[%c0_61, %c0_62, %c0_63], %70 {strides = array<i32>} : memref<1x4x128xf32, #tpu.memory_space<vmem>>, vector<1x4x128xf32>,
    return
  }
  func.func @transform_0(%arg0: i32) -> (i32, i32, i32) {
    %c0_i32 = arith.constant 0 : i32
    %c0_i32_0 = arith.constant 0 : i32
    %c0_i32_1 = arith.constant 0 : i32
    return %arg0, %c0_i32, %c0_i32_0 : i32, i32, i32
  }
  func.func @transform_1(%arg0: i32) -> (i32, i32, i32) {
    %c0_i32 = arith.constant 0 : i32
    %c0_i32_0 = arith.constant 0 : i32
    %c0_i32_1 = arith.constant 0 : i32
    %c0_i32_2 = arith.constant 0 : i32
    return %c0_i32, %c0_i32_0, %c0_i32_1 : i32, i32, i32
  }
  func.func @transform_2(%arg0: i32) -> (i32, i32) {
    %c0_i32 = arith.constant 0 : i32
    %c0_i32_0 = arith.constant 0 : i32
    %c0_i32_1 = arith.constant 0 : i32
    return %c0_i32, %c0_i32_0 : i32, i32
  }
  func.func @transform_3(%arg0: i32) -> (i32, i32, i32) {
    %c0_i32 = arith.constant 0 : i32
    %c0_i32_0 = arith.constant 0 : i32
    %c0_i32_1 = arith.constant 0 : i32
    %c0_i32_2 = arith.constant 0 : i32
    return %c0_i32, %c0_i32_0, %c0_i32_1 : i32, i32, i32
  }
  func.func @transform_4(%arg0: i32) -> (i32, i32, i32) {
    %c0_i32 = arith.constant 0 : i32
    %c0_i32_0 = arith.constant 0 : i32
    %c0_i32_1 = arith.constant 0 : i32
    %c0_i32_2 = arith.constant 0 : i32
    return %c0_i32, %c0_i32_0, %c0_i32_1 : i32, i32, i32
  }
  func.func @transform_5(%arg0: i32) -> (i32, i32, i32) {
    %c0_i32 = arith.constant 0 : i32
    %c0_i32_0 = arith.constant 0 : i32
    %c0_i32_1 = arith.constant 0 : i32
    %c0_i32_2 = arith.constant 0 : i32
    return %c0_i32, %c0_i32_0, %c0_i32_1 : i32, i32, i32
  }
  func.func @transform_6(%arg0: i32) -> (i32, i32) {
    %c0_i32 = arith.constant 0 : i32
    %c0_i32_0 = arith.constant 0 : i32
    %c0_i32_1 = arith.constant 0 : i32
    return %c0_i32, %c0_i32_0 : i32, i32
  }
  func.func @transform_7(%arg0: i32) -> (i32, i32, i32) {
    %c0_i32 = arith.constant 0 : i32
    %c0_i32_0 = arith.constant 0 : i32
    %c0_i32_1 = arith.constant 0 : i32
    %c0_i32_2 = arith.constant 0 : i32
    return %c0_i32, %c0_i32_0, %c0_i32_1 : i32, i32, i32
  }
  func.func @transform_8(%arg0: i32) -> (i32, i32, i32) {
    %c0_i32 = arith.constant 0 : i32
    %c0_i32_0 = arith.constant 0 : i32
    %c0_i32_1 = arith.constant 0 : i32
    %c0_i32_2 = arith.constant 0 : i32
    return %c0_i32, %c0_i32_0, %c0_i32_1 : i32, i32, i32
  }
  func.func @transform_9(%arg0: i32) -> (i32, i32, i32) {
    %c0_i32 = arith.constant 0 : i32
    %c0_i32_0 = arith.constant 0 : i32
    %c0_i32_1 = arith.constant 0 : i32
    return %arg0, %c0_i32, %c0_i32_0 : i32, i32, i32
  }
}

</mosaic_0001>

<llo_original>
// kernel: alex_bottom_forward.1
$region0: #{alex_bottom_forward.1}
  #allocation0 [shape = 'u32[]', space=smem, size = 0x4, offset = 0x4, fixed_abs, tag = 'smem constant byte address 0x4 - core index']
  #allocation1 [shape = 'u32[144,128]{1,0:T(1,128)}', space=vmem, size = 0x12000, scoped, tag = 'internal scratch']
  %s0 = inlined_call_operand.vmem [shape: f32[2,18,72], index: 0, kind: input, shape index: {}]
  %s1 = inlined_call_operand.hbm [shape: f32[3,72,256], index: 1, kind: input, shape index: {}]
  %s2 = inlined_call_operand.vmem [shape: f32[1,256], index: 2, kind: input, shape index: {}]
  %s3 = inlined_call_operand.hbm [shape: f32[2,256,160], index: 3, kind: input, shape index: {}]
  %s4 = inlined_call_operand.vmem [shape: f32[2,10,16], index: 4, kind: input, shape index: {}]
  %s5 = inlined_call_operand.hbm [shape: f32[3,160,256], index: 5, kind: input, shape index: {}]
  %s6 = inlined_call_operand.vmem [shape: f32[1,256], index: 6, kind: input, shape index: {}]
  %s7 = inlined_call_operand.vmem [shape: f32[2,256,128], index: 7, kind: input, shape index: {}]
  %s8 = inlined_call_operand.vmem [shape: f32[2,4,8], index: 8, kind: input, shape index: {}]
  %s9 = inlined_call_operand.vmem [shape: f32[2,4,128], index: 9, kind: output, shape index: {}]
  %s10 = sld [smem:[#allocation0]]
  $region81: #{alex_bottom_forward.1} parent=0
    _
  %s12 = ssub.s32 1, %s10
  %s13 = scalar_select 0, %s12, %s10
  $region1: #{alex_bottom_forward.1} parent=0
    #allocation2 [shape = 'u8[221184]{0}', space=vmem, size = 0x36000, scoped, tag = 'input window, operand 1, single buffered']
    #allocation3 [shape = 's32[2]{0}', space=sflag, size = 0x8, scoped, tag = 'scoped memory for alex_bottom_forward.1']
    #allocation4 [shape = 'u8[524288]{0}', space=vmem, size = 0x80000, scoped, tag = 'input window, operand 3, single buffered']
    #allocation5 [shape = 's32[1]{0}', space=sflag, size = 0x4, scoped, tag = 'scoped memory for alex_bottom_forward.1']
    #allocation6 [shape = 'u8[491520]{0}', space=vmem, size = 0x78000, scoped, tag = 'input window, operand 5, single buffered']
    %14 = vsyncpa [#allocation3], 0
    %15 = vsyncpa [#allocation5], 0
    loop: start=0, step=1, limit=4
    $region2: #{alex_bottom_forward.1} parent=1 // loop_pre_header
      _
    $region3: #{alex_bottom_forward.1} parent=1 // loop_header
      %s17 = sphi 0, %s21
      %p18 = scmp.ge.s32.totalorder %s17, 4
      %s27 = sphi 0, %s29
      %s30 = sphi 0, %s27
      %s31 = sphi 0, %s30
      %s47 = sphi 0, %s31
      %s51 = sphi 0, %s51
      %s53 = sphi 0, %s51
      %s54 = sphi 0, %s53
      %s68 = sphi 0, %s54
      %s72 = sphi 0, %s72
      %s74 = sphi 0, %s72
      %s75 = sphi 0, %s74
      %s89 = sphi 0, %s75
      %s93 = sphi 0, %s93
      %s95 = sphi 0, %s93
      %s96 = sphi 0, %s95
      %s110 = sphi 0, %s96
      %s114 = sphi 0, %s114
      %s116 = sphi 0, %s114
      %s117 = sphi 0, %s116
      %s131 = sphi 0, %s117
      %s135 = sphi 0, %s135
      %s137 = sphi 0, %s135
      %s138 = sphi 0, %s137
      %s152 = sphi 0, %s138
      %s156 = sphi 0, %s156
      %s158 = sphi 0, %s156
      %s159 = sphi 0, %s158
      %s173 = sphi 0, %s159
      %s177 = sphi 0, %s177
      %s179 = sphi 0, %s177
      %s180 = sphi 0, %s179
      %s194 = sphi 0, %s180
      %s198 = sphi 0, %s198
      %s200 = sphi 0, %s198
      %s201 = sphi 0, %s200
      %s215 = sphi 0, %s201
      %s221 = sphi 0, %s223
      %s224 = sphi 0, %s221
      %s225 = sphi 0, %s224
      %s241 = sphi 0, %s225
    $region4: #{alex_bottom_forward.1} parent=1 // loop_header_branch
      %20 = sbr.rel (%p18) target = $region8
    $region5: #{alex_bottom_forward.1} parent=1 // loop_body
      %s22 = ssub.s32 %s17, 1
      %s23 = ssub.s32 %s17, 2
      %s24 = sadd.s32 %s17, 1
      %s25 = ssub.s32 %s17, %s24
      %p26 = scmp.eq.s32.totalorder %s25, 0
      %s28 = sadd.s32 %s27, 1
      %s29 = scalar_select %p26, %s27, %s28
      %p32 = pneg %p26
      %p33 = scmp.eq.s32.totalorder %s17, 1
      %p34 = por %p32, %p33
      %p35 = scmp.ne.s32.totalorder %s27, %s30
      %p36 = scmp.eq.s32.totalorder %s17, 0
      %p37 = por %p35, %p36
      %p38 = scmp.ne.s32.totalorder %s27, %s30
      %p39 = scmp.eq.s32.totalorder %s22, 1
      %p40 = por %p38, %p39
      %p41 = scmp.ne.s32.totalorder %s30, %s31
      %p42 = scmp.eq.s32.totalorder %s22, 0
      %p43 = por %p41, %p42
      %p44 = scmp.ne.s32.totalorder %s30, %s31
      %p45 = scmp.eq.s32.totalorder %s23, 1
      %p46 = por %p44, %p45
      %p48 = scmp.ne.s32.totalorder %s31, %s47
      %p49 = scmp.eq.s32.totalorder %s23, 0
      %p50 = por %p48, %p49
      %s52 = sadd.s32 %s51, 1
      %p55 = scmp.eq.s32.totalorder %s17, 1
      %p56 = scmp.ne.s32.totalorder %s51, %s53
      %p57 = scmp.eq.s32.totalorder %s17, 0
      %p58 = por %p56, %p57
      %p59 = scmp.ne.s32.totalorder %s51, %s53
      %p60 = scmp.eq.s32.totalorder %s22, 1
      %p61 = por %p59, %p60
      %p62 = scmp.ne.s32.totalorder %s53, %s54
      %p63 = scmp.eq.s32.totalorder %s22, 0
      %p64 = por %p62, %p63
      %p65 = scmp.ne.s32.totalorder %s53, %s54
      %p66 = scmp.eq.s32.totalorder %s23, 1
      %p67 = por %p65, %p66
      %p69 = scmp.ne.s32.totalorder %s54, %s68
      %p70 = scmp.eq.s32.totalorder %s23, 0
      %p71 = por %p69, %p70
      %s73 = sadd.s32 %s72, 1
      %p76 = scmp.eq.s32.totalorder %s17, 1
      %p77 = scmp.ne.s32.totalorder %s72, %s74
      %p78 = scmp.eq.s32.totalorder %s17, 0
      %p79 = por %p77, %p78
      %p80 = scmp.ne.s32.totalorder %s72, %s74
      %p81 = scmp.eq.s32.totalorder %s22, 1
      %p82 = por %p80, %p81
      %p83 = scmp.ne.s32.totalorder %s74, %s75
      %p84 = scmp.eq.s32.totalorder %s22, 0
      %p85 = por %p83, %p84
      %p86 = scmp.ne.s32.totalorder %s74, %s75
      %p87 = scmp.eq.s32.totalorder %s23, 1
      %p88 = por %p86, %p87
      %p90 = scmp.ne.s32.totalorder %s75, %s89
      %p91 = scmp.eq.s32.totalorder %s23, 0
      %p92 = por %p90, %p91
      %s94 = sadd.s32 %s93, 1
      %p97 = scmp.eq.s32.totalorder %s17, 1
      %p98 = scmp.ne.s32.totalorder %s93, %s95
      %p99 = scmp.eq.s32.totalorder %s17, 0
      %p100 = por %p98, %p99
      %p101 = scmp.ne.s32.totalorder %s93, %s95
      %p102 = scmp.eq.s32.totalorder %s22, 1
      %p103 = por %p101, %p102
      %p104 = scmp.ne.s32.totalorder %s95, %s96
      %p105 = scmp.eq.s32.totalorder %s22, 0
      %p106 = por %p104, %p105
      %p107 = scmp.ne.s32.totalorder %s95, %s96
      %p108 = scmp.eq.s32.totalorder %s23, 1
      %p109 = por %p107, %p108
      %p111 = scmp.ne.s32.totalorder %s96, %s110
      %p112 = scmp.eq.s32.totalorder %s23, 0
      %p113 = por %p111, %p112
      %s115 = sadd.s32 %s114, 1
      %p118 = scmp.eq.s32.totalorder %s17, 1
      %p119 = scmp.ne.s32.totalorder %s114, %s116
      %p120 = scmp.eq.s32.totalorder %s17, 0
      %p121 = por %p119, %p120
      %p122 = scmp.ne.s32.totalorder %s114, %s116
      %p123 = scmp.eq.s32.totalorder %s22, 1
      %p124 = por %p122, %p123
      %p125 = scmp.ne.s32.totalorder %s116, %s117
      %p126 = scmp.eq.s32.totalorder %s22, 0
      %p127 = por %p125, %p126
      %p128 = scmp.ne.s32.totalorder %s116, %s117
      %p129 = scmp.eq.s32.totalorder %s23, 1
      %p130 = por %p128, %p129
      %p132 = scmp.ne.s32.totalorder %s117, %s131
      %p133 = scmp.eq.s32.totalorder %s23, 0
      %p134 = por %p132, %p133
      %s136 = sadd.s32 %s135, 1
      %p139 = scmp.eq.s32.totalorder %s17, 1
      %p140 = scmp.ne.s32.totalorder %s135, %s137
      %p141 = scmp.eq.s32.totalorder %s17, 0
      %p142 = por %p140, %p141
      %p143 = scmp.ne.s32.totalorder %s135, %s137
      %p144 = scmp.eq.s32.totalorder %s22, 1
      %p145 = por %p143, %p144
      %p146 = scmp.ne.s32.totalorder %s137, %s138
      %p147 = scmp.eq.s32.totalorder %s22, 0
      %p148 = por %p146, %p147
      %p149 = scmp.ne.s32.totalorder %s137, %s138
      %p150 = scmp.eq.s32.totalorder %s23, 1
      %p151 = por %p149, %p150
      %p153 = scmp.ne.s32.totalorder %s138, %s152
      %p154 = scmp.eq.s32.totalorder %s23, 0
      %p155 = por %p153, %p154
      %s157 = sadd.s32 %s156, 1
      %p160 = scmp.eq.s32.totalorder %s17, 1
      %p161 = scmp.ne.s32.totalorder %s156, %s158
      %p162 = scmp.eq.s32.totalorder %s17, 0
      %p163 = por %p161, %p162
      %p164 = scmp.ne.s32.totalorder %s156, %s158
      %p165 = scmp.eq.s32.totalorder %s22, 1
      %p166 = por %p164, %p165
      %p167 = scmp.ne.s32.totalorder %s158, %s159
      %p168 = scmp.eq.s32.totalorder %s22, 0
      %p169 = por %p167, %p168
      %p170 = scmp.ne.s32.totalorder %s158, %s159
      %p171 = scmp.eq.s32.totalorder %s23, 1
      %p172 = por %p170, %p171
      %p174 = scmp.ne.s32.totalorder %s159, %s173
      %p175 = scmp.eq.s32.totalorder %s23, 0
      %p176 = por %p174, %p175
      %s178 = sadd.s32 %s177, 1
      %p181 = scmp.eq.s32.totalorder %s17, 1
      %p182 = scmp.ne.s32.totalorder %s177, %s179
      %p183 = scmp.eq.s32.totalorder %s17, 0
      %p184 = por %p182, %p183
      %p185 = scmp.ne.s32.totalorder %s177, %s179
      %p186 = scmp.eq.s32.totalorder %s22, 1
      %p187 = por %p185, %p186
      %p188 = scmp.ne.s32.totalorder %s179, %s180
      %p189 = scmp.eq.s32.totalorder %s22, 0
      %p190 = por %p188, %p189
      %p191 = scmp.ne.s32.totalorder %s179, %s180
      %p192 = scmp.eq.s32.totalorder %s23, 1
      %p193 = por %p191, %p192
      %p195 = scmp.ne.s32.totalorder %s180, %s194
      %p196 = scmp.eq.s32.totalorder %s23, 0
      %p197 = por %p195, %p196
      %s199 = sadd.s32 %s198, 1
      %p202 = scmp.eq.s32.totalorder %s17, 1
      %p203 = scmp.ne.s32.totalorder %s198, %s200
      %p204 = scmp.eq.s32.totalorder %s17, 0
      %p205 = por %p203, %p204
      %p206 = scmp.ne.s32.totalorder %s198, %s200
      %p207 = scmp.eq.s32.totalorder %s22, 1
      %p208 = por %p206, %p207
      %p209 = scmp.ne.s32.totalorder %s200, %s201
      %p210 = scmp.eq.s32.totalorder %s22, 0
      %p211 = por %p209, %p210
      %p212 = scmp.ne.s32.totalorder %s200, %s201
      %p213 = scmp.eq.s32.totalorder %s23, 1
      %p214 = por %p212, %p213
      %p216 = scmp.ne.s32.totalorder %s201, %s215
      %p217 = scmp.eq.s32.totalorder %s23, 0
      %p218 = por %p216, %p217
      %s219 = ssub.s32 %s17, %s24
      %p220 = scmp.eq.s32.totalorder %s219, 0
      %s222 = sadd.s32 %s221, 1
      %s223 = scalar_select %p220, %s221, %s222
      %p226 = pneg %p220
      %p227 = scmp.eq.s32.totalorder %s17, 1
      %p228 = por %p226, %p227
      %p229 = scmp.ne.s32.totalorder %s221, %s224
      %p230 = scmp.eq.s32.totalorder %s17, 0
      %p231 = por %p229, %p230
      %p232 = scmp.ne.s32.totalorder %s221, %s224
      %p233 = scmp.eq.s32.totalorder %s22, 1
      %p234 = por %p232, %p233
      %p235 = scmp.ne.s32.totalorder %s224, %s225
      %p236 = scmp.eq.s32.totalorder %s22, 0
      %p237 = por %p235, %p236
      %p238 = scmp.ne.s32.totalorder %s224, %s225
      %p239 = scmp.eq.s32.totalorder %s23, 1
      %p240 = por %p238, %p239
      %p242 = scmp.ne.s32.totalorder %s225, %s241
      %p243 = scmp.eq.s32.totalorder %s23, 0
      %p244 = por %p242, %p243
      %p245 = scmp.le.s32.totalorder 1, %s17
      %p246 = scmp.lt.s32.totalorder %s17, 3
      %p247 = pnand %p245, %p246
      %p248 = pneg %p247
      // Predicated region
      $region9: #{alex_bottom_forward.1} parent=5 // pred_check
        _
      $region10: #{alex_bottom_forward.1} parent=5 // pred_check_branch
        %250 = sbr.rel (%p247) target = $region12
      $region11: #{alex_bottom_forward.1} parent=5 // pred_region
        %s251 = ssub.s32 %s17, 1
        // Predicated region
        $region13: #{alex_bottom_forward.1} parent=11 // pred_check
          %p252 = pneg %p64
        $region14: #{alex_bottom_forward.1} parent=11 // pred_check_branch
          %254 = sbr.rel (%p252) target = $region16
        $region15: #{alex_bottom_forward.1} parent=11 // pred_region
          %s256 = ssub.s32 6912, 6912
          %257 = vsyncadd [#allocation3], %s256
          %s258 = sshll.u32 [#allocation2], 4
          %s259 = int_to_ptr.vmem [resolvable:$true] %s258
          %264 = dma.hbm_to_vmem [thread:$0]  %s1, 6912, %s259, [#allocation3], 256, 256, 16
        $region16: #{alex_bottom_forward.1} parent=11 // pred_fallthru
          _
        // Predicated region
        $region17: #{alex_bottom_forward.1} parent=11 // pred_check
          %p265 = pneg %p85
        $region18: #{alex_bottom_forward.1} parent=11 // pred_check_branch
          %267 = sbr.rel (%p265) target = $region20
        $region19: #{alex_bottom_forward.1} parent=11 // pred_region
          _
        $region20: #{alex_bottom_forward.1} parent=11 // pred_fallthru
          _
        // Predicated region
        $region21: #{alex_bottom_forward.1} parent=11 // pred_check
          %p268 = pneg %p106
        $region22: #{alex_bottom_forward.1} parent=11 // pred_check_branch
          %270 = sbr.rel (%p268) target = $region24
        $region23: #{alex_bottom_forward.1} parent=11 // pred_region
          %s272 = ssub.s32 16384, 16384
          %273 = vsyncadd [#allocation5], %s272
          %s274 = sshll.u32 [#allocation4], 4
          %s275 = int_to_ptr.vmem [resolvable:$true] %s274
          %280 = dma.hbm_to_vmem [thread:$0]  %s3, 16384, %s275, [#allocation5], 256, 256, 16
        $region24: #{alex_bottom_forward.1} parent=11 // pred_fallthru
          _
        // Predicated region
        $region25: #{alex_bottom_forward.1} parent=11 // pred_check
          %p281 = pneg %p127
        $region26: #{alex_bottom_forward.1} parent=11 // pred_check_branch
          %283 = sbr.rel (%p281) target = $region28
        $region27: #{alex_bottom_forward.1} parent=11 // pred_region
          _
        $region28: #{alex_bottom_forward.1} parent=11 // pred_fallthru
          _
        // Predicated region
        $region29: #{alex_bottom_forward.1} parent=11 // pred_check
          %p284 = pneg %p148
        $region30: #{alex_bottom_forward.1} parent=11 // pred_check_branch
          %286 = sbr.rel (%p284) target = $region32
        $region31: #{alex_bottom_forward.1} parent=11 // pred_region
          %s288 = ssub.s32 15360, 15360
          %289 = vsyncadd [#allocation5], %s288
          %s290 = sshll.u32 [#allocation6], 4
          %s291 = int_to_ptr.vmem [resolvable:$true] %s290
          %296 = dma.hbm_to_vmem [thread:$0]  %s5, 15360, %s291, [#allocation5], 256, 256, 16
        $region32: #{alex_bottom_forward.1} parent=11 // pred_fallthru
          _
        // Predicated region
        $region33: #{alex_bottom_forward.1} parent=11 // pred_check
          %p297 = pneg %p169
        $region34: #{alex_bottom_forward.1} parent=11 // pred_check_branch
          %299 = sbr.rel (%p297) target = $region36
        $region35: #{alex_bottom_forward.1} parent=11 // pred_region
          _
        $region36: #{alex_bottom_forward.1} parent=11 // pred_fallthru
          _
        // Predicated region
        $region37: #{alex_bottom_forward.1} parent=11 // pred_check
          %p300 = pneg %p190
        $region38: #{alex_bottom_forward.1} parent=11 // pred_check_branch
          %302 = sbr.rel (%p300) target = $region40
        $region39: #{alex_bottom_forward.1} parent=11 // pred_region
          _
        $region40: #{alex_bottom_forward.1} parent=11 // pred_fallthru
          _
        // Predicated region
        $region41: #{alex_bottom_forward.1} parent=11 // pred_check
          %p303 = pneg %p211
        $region42: #{alex_bottom_forward.1} parent=11 // pred_check_branch
          %305 = sbr.rel (%p303) target = $region44
        $region43: #{alex_bottom_forward.1} parent=11 // pred_region
          _
        $region44: #{alex_bottom_forward.1} parent=11 // pred_fallthru
          _
      $region12: #{alex_bottom_forward.1} parent=5 // pred_fallthru
        _
      %p306 = scmp.lt.s32.totalorder %s17, 2
      // Predicated region
      $region45: #{alex_bottom_forward.1} parent=5 // pred_check
        %p307 = pneg %p306
      $region46: #{alex_bottom_forward.1} parent=5 // pred_check_branch
        %309 = sbr.rel (%p307) target = $region48
      $region47: #{alex_bottom_forward.1} parent=5 // pred_region
        // Predicated region
        $region49: #{alex_bottom_forward.1} parent=47 // pred_check
          %p310 = pneg %p37
        $region50: #{alex_bottom_forward.1} parent=47 // pred_check_branch
          %312 = sbr.rel (%p310) target = $region52
        $region51: #{alex_bottom_forward.1} parent=47 // pred_region
          %p313 = scmp.lt.s32.totalorder %s17, 1
          %s314 = scalar_select %p313, %s17, 1
          %s315 = smul.addr %s314, 3
          %s316 = smul.addr %s315, 8
          %s317 = scalar_lea.vmem %s0, %s316
        $region52: #{alex_bottom_forward.1} parent=47 // pred_fallthru
          _
      $region48: #{alex_bottom_forward.1} parent=5 // pred_fallthru
        _
      %p318 = scmp.le.s32.totalorder 1, %s17
      %p319 = scmp.lt.s32.totalorder %s17, 3
      %p320 = pnand %p318, %p319
      %p321 = pneg %p320
      // Predicated region
      $region53: #{alex_bottom_forward.1} parent=5 // pred_check
        _
      $region54: #{alex_bottom_forward.1} parent=5 // pred_check_branch
        %323 = sbr.rel (%p320) target = $region56
      $region55: #{alex_bottom_forward.1} parent=5 // pred_region
        %s324 = ssub.s32 %s17, 1
        // Predicated region
        $region57: #{alex_bottom_forward.1} parent=55 // pred_check
          %p325 = pneg %p64
        $region58: #{alex_bottom_forward.1} parent=55 // pred_check_branch
          %327 = sbr.rel (%p325) target = $region60
        $region59: #{alex_bottom_forward.1} parent=55 // pred_region
          %328 = dma.done [#allocation3], 6912
        $region60: #{alex_bottom_forward.1} parent=55 // pred_fallthru
          _
        // Predicated region
        $region61: #{alex_bottom_forward.1} parent=55 // pred_check
          %p329 = pneg %p106
        $region62: #{alex_bottom_forward.1} parent=55 // pred_check_branch
          %331 = sbr.rel (%p329) target = $region64
        $region63: #{alex_bottom_forward.1} parent=55 // pred_region
          %332 = dma.done [#allocation5], 16384
        $region64: #{alex_bottom_forward.1} parent=55 // pred_fallthru
          _
        // Predicated region
        $region65: #{alex_bottom_forward.1} parent=55 // pred_check
          %p333 = pneg %p148
        $region66: #{alex_bottom_forward.1} parent=55 // pred_check_branch
          %335 = sbr.rel (%p333) target = $region68
        $region67: #{alex_bottom_forward.1} parent=55 // pred_region
          %336 = dma.done [#allocation5], 15360
        $region68: #{alex_bottom_forward.1} parent=55 // pred_fallthru
          _
        %p337 = scmp.lt.s32.totalorder %s22, 1
        %s338 = scalar_select %p337, %s22, 1
        %s339 = smul.addr %s338, 3
        %s340 = smul.addr %s339, 8
        %s341 = scalar_lea.vmem %s0, %s340
        %p342 = pneg %p43
        %p343 = pneg %p40
        %p344 = pneg %p64
        %p345 = pneg %p61
        %p346 = pneg %p85
        %p347 = pneg %p82
        %p348 = pneg %p106
        %p349 = pneg %p103
        %p350 = pneg %p127
        %p351 = pneg %p124
        %p352 = pneg %p148
        %p353 = pneg %p145
        %p354 = pneg %p169
        %p355 = pneg %p166
        %p356 = pneg %p190
        %p357 = pneg %p187
        %p358 = pneg %p211
        %p359 = pneg %p208
        %p360 = pneg %p237
        %p361 = pneg %p234
        %p362 = scmp.lt.s32.totalorder %s22, 1
        %s363 = scalar_select %p362, %s22, 1
        %s364 = smul.addr %s363, 4
        %s365 = scalar_lea.vmem %s9, %s364
        %p366 = scmp.lt.s32.totalorder %s22, 1
        %s367 = scalar_select %p366, %s22, 1
        %s368 = smul.addr %s367, 3
        %s369 = smul.addr %s368, 8
        %s370 = scalar_lea.vmem %s0, %s369
        %p371 = scmp.lt.s32.totalorder %s22, 1
        %s372 = scalar_select %p371, %s22, 1
        %s373 = smul.addr %s372, 4
        %s374 = scalar_lea.vmem %s9, %s373
        %v375 = vld [vmem:[%s370] sm:$0xff]
        %v376 = vld [vmem:[%s370 + $0x8] sm:$0xff]
        %v377 = vld [vmem:[%s370 + $0x10] sm:$0x3]
        %v378 = vld [vmem:[%s2] sm:$0x3]
        %v379 = vld [vmem:[#allocation2] sm:$0xff]
        %v380 = vld [vmem:[#allocation2 + $0x8] sm:$0xff]
        %v381 = vld [vmem:[#allocation2 + $0x10] sm:$0xff]
        %v382 = vld [vmem:[#allocation2 + $0x18] sm:$0xff]
        %v383 = vld [vmem:[#allocation2 + $0x20] sm:$0xff]
        %v384 = vld [vmem:[#allocation2 + $0x28] sm:$0xff]
        %v385 = vld [vmem:[#allocation2 + $0x30] sm:$0xff]
        %v386 = vld [vmem:[#allocation2 + $0x38] sm:$0xff]
        %v387 = vld [vmem:[#allocation2 + $0x40] sm:$0xff]
        %v388 = vld [vmem:[#allocation2 + $0x48] sm:$0xff]
        %v389 = vld [vmem:[#allocation2 + $0x50] sm:$0xff]
        %v390 = vld [vmem:[#allocation2 + $0x58] sm:$0xff]
        %v391 = vld [vmem:[#allocation2 + $0x60] sm:$0xff]
        %v392 = vld [vmem:[#allocation2 + $0x68] sm:$0xff]
        %v393 = vld [vmem:[#allocation2 + $0x70] sm:$0xff]
        %v394 = vld [vmem:[#allocation2 + $0x78] sm:$0xff]
        %v395 = vld [vmem:[#allocation2 + $0x80] sm:$0xff]
        %v396 = vld [vmem:[#allocation2 + $0x88] sm:$0xff]
        %vm397 = vcmask 588800
        %v399 = vsel %vm397, %v375, 0
        %v402 = vsel %vm397, %v376, 0
        %404 = vmatprep.subr.mxu0 %v380
        %405 = vmatpush1.msra.mxu0 %v379
        %406 = vmatprep.subr.mxu0 %v382
        %407 = vmatpush1.msra.mxu0 %v381
        %408 = vmatprep.subr.mxu0 %v384
        %409 = vmatpush1.msra.mxu0 %v383
        %410 = vmatprep.subr.mxu0 %v386
        %411 = vmatpush1.msra.mxu0 %v385
        %412 = vmatprep.subr.mxu0 %v388
        %413 = vmatpush1.msra.mxu0 %v387
        %414 = vmatprep.subr.mxu0 %v390
        %415 = vmatpush1.msra.mxu0 %v389
        %416 = vmatprep.subr.mxu0 %v392
        %417 = vmatpush1.msra.mxu0 %v391
        %418 = vmatprep.subr.mxu0 %v394
        %419 = vmatpush1.msra.mxu0 %v393
        %420 = vmatprep.subr.mxu0 %v396
        %421 = vmatpush1.msra.mxu0 %v395
        %422 = vmatprep.subr.mxu0 0.0
        %423 = vmatpush1.msra.mxu0 0.0
        %424 = vmatprep.subr.mxu0 0.0
        %425 = vmatpush1.msra.mxu0 0.0
        %426 = vmatprep.subr.mxu0 0.0
        %427 = vmatpush1.msra.mxu0 0.0
        %428 = vmatprep.subr.mxu0 0.0
        %429 = vmatpush1.msra.mxu0 0.0
        %430 = vmatprep.subr.mxu0 0.0
        %431 = vmatpush1.msra.mxu0 0.0
        %432 = vmatprep.subr.mxu0 0.0
        %433 = vmatpush1.msra.mxu0 0.0
        %434 = vmatprep.subr.mxu0 0.0
        %435 = vmatpush1.msra.mxu0 0.0
        %436 = vmatprep.subr.mxu0 0.0
        %437 = vmatpush1.msra.mxu0 0.0
        %438 = vmatprep.subr.mxu0 0.0
        %439 = vmatpush1.msra.mxu0 0.0
        %440 = vmatprep.subr.mxu0 0.0
        %441 = vmatpush1.msra.mxu0 0.0
        %442 = vmatprep.subr.mxu0 0.0
        %443 = vmatpush1.msra.mxu0 0.0
        %444 = vmatprep.subr.mxu0 0.0
        %445 = vmatpush1.msra.mxu0 0.0
        %446 = vmatprep.subr.mxu0 0.0
        %447 = vmatpush1.msra.mxu0 0.0
        %448 = vmatprep.subr.mxu0 0.0
        %449 = vmatpush1.msra.mxu0 0.0
        %450 = vmatprep.subr.mxu0 0.0
        %451 = vmatpush1.msra.mxu0 0.0
        %452 = vmatprep.subr.mxu0 0.0
        %453 = vmatpush1.msra.mxu0 0.0
        %454 = vmatprep.subr.mxu0 0.0
        %455 = vmatpush1.msra.mxu0 0.0
        %456 = vmatprep.subr.mxu0 0.0
        %457 = vmatpush1.msra.mxu0 0.0
        %458 = vmatprep.subr.mxu0 0.0
        %459 = vmatpush1.msra.mxu0 0.0
        %460 = vmatprep.subr.mxu0 0.0
        %461 = vmatpush1.msra.mxu0 0.0
        %462 = vmatprep.subr.mxu0 0.0
        %463 = vmatpush1.msra.mxu0 0.0
        %464 = vmatprep.subr.mxu0 0.0
        %465 = vmatpush1.msra.mxu0 0.0
        %466 = vmatprep.subr.mxu0 0.0
        %467 = vmatpush1.msra.mxu0 0.0
        %468 = vmatprep.mubr.f32.mxu0 0.0
        %469 = vmatmul.mubr.f32.gmra.mrb[0].mxu0 %v399
        %v470 = vpop.f32.mrb[0].mxu0
        %v471 = vadd.f32 0.0, %v470
        %v472 = vpop.f32.mrb[0].mxu0
        %v473 = vadd.f32 0.0, %v472
        %474 = vmatprep.mubr.f32.mxu0 0.0
        %475 = vmatmul.mubr.f32.gmra.mrb[0].mxu0 %v402
        %v476 = vpop.f32.mrb[0].mxu0
        %v477 = vadd.f32 0.0, %v476
        %v478 = vpop.f32.mrb[0].mxu0
        %v479 = vadd.f32 0.0, %v478
        %480 = vdwg.mxu0
        %v482 = vlaneseq
        %v483 = vshrl.u32 %v482, 7
        %v484 = vsub.s32 0, %v483
        %v485 = vrot.slane %v378, %v484
        %v486 = vlaneseq
        %v487 = vshrl.u32 %v486, 7
        %v488 = vsub.s32 1, %v487
        %v489 = vrot.slane %v378, %v488
        %v492 = vadd.f32 %v485, %v471
        %v493 = vadd.f32 %v489, %v473
        %v494 = vadd.f32 %v485, %v477
        %v495 = vadd.f32 %v489, %v479
        %s496 = scalar_lea.vmem [#allocation2], 144
        %v497 = vld [vmem:[%s496] sm:$0xff]
        %v498 = vld [vmem:[%s496 + $0x8] sm:$0xff]
        %v499 = vld [vmem:[%s496 + $0x10] sm:$0xff]
        %v500 = vld [vmem:[%s496 + $0x18] sm:$0xff]
        %v501 = vld [vmem:[%s496 + $0x20] sm:$0xff]
        %v502 = vld [vmem:[%s496 + $0x28] sm:$0xff]
        %v503 = vld [vmem:[%s496 + $0x30] sm:$0xff]
        %v504 = vld [vmem:[%s496 + $0x38] sm:$0xff]
        %v505 = vld [vmem:[%s496 + $0x40] sm:$0xff]
        %v506 = vld [vmem:[%s496 + $0x48] sm:$0xff]
        %v507 = vld [vmem:[%s496 + $0x50] sm:$0xff]
        %v508 = vld [vmem:[%s496 + $0x58] sm:$0xff]
        %v509 = vld [vmem:[%s496 + $0x60] sm:$0xff]
        %v510 = vld [vmem:[%s496 + $0x68] sm:$0xff]
        %v511 = vld [vmem:[%s496 + $0x70] sm:$0xff]
        %v512 = vld [vmem:[%s496 + $0x78] sm:$0xff]
        %v513 = vld [vmem:[%s496 + $0x80] sm:$0xff]
        %v514 = vld [vmem:[%s496 + $0x88] sm:$0xff]
        %vm516 = vcmask 1046528
        %v517 = vrot.slane %v375, 1
        %v518 = vrot.slane %v376, 1
        %v519 = vsel %vm516, %v517, %v518
        %v520 = vrot.slane %v377, 1
        %v521 = vsel %vm516, %v518, %v520
        %v522 = vsel %vm397, %v519, 0
        %v524 = vsel %vm397, %v521, 0
        %526 = vmatprep.subr.mxu0 %v498
        %527 = vmatpush1.msra.mxu0 %v497
        %528 = vmatprep.subr.mxu0 %v500
        %529 = vmatpush1.msra.mxu0 %v499
        %530 = vmatprep.subr.mxu0 %v502
        %531 = vmatpush1.msra.mxu0 %v501
        %532 = vmatprep.subr.mxu0 %v504
        %533 = vmatpush1.msra.mxu0 %v503
        %534 = vmatprep.subr.mxu0 %v506
        %535 = vmatpush1.msra.mxu0 %v505
        %536 = vmatprep.subr.mxu0 %v508
        %537 = vmatpush1.msra.mxu0 %v507
        %538 = vmatprep.subr.mxu0 %v510
        %539 = vmatpush1.msra.mxu0 %v509
        %540 = vmatprep.subr.mxu0 %v512
        %541 = vmatpush1.msra.mxu0 %v511
        %542 = vmatprep.subr.mxu0 %v514
        %543 = vmatpush1.msra.mxu0 %v513
        %544 = vmatprep.subr.mxu0 0.0
        %545 = vmatpush1.msra.mxu0 0.0
        %546 = vmatprep.subr.mxu0 0.0
        %547 = vmatpush1.msra.mxu0 0.0
        %548 = vmatprep.subr.mxu0 0.0
        %549 = vmatpush1.msra.mxu0 0.0
        %550 = vmatprep.subr.mxu0 0.0
        %551 = vmatpush1.msra.mxu0 0.0
        %552 = vmatprep.subr.mxu0 0.0
        %553 = vmatpush1.msra.mxu0 0.0
        %554 = vmatprep.subr.mxu0 0.0
        %555 = vmatpush1.msra.mxu0 0.0
        %556 = vmatprep.subr.mxu0 0.0
        %557 = vmatpush1.msra.mxu0 0.0
        %558 = vmatprep.subr.mxu0 0.0
        %559 = vmatpush1.msra.mxu0 0.0
        %560 = vmatprep.subr.mxu0 0.0
        %561 = vmatpush1.msra.mxu0 0.0
        %562 = vmatprep.subr.mxu0 0.0
        %563 = vmatpush1.msra.mxu0 0.0
        %564 = vmatprep.subr.mxu0 0.0
        %565 = vmatpush1.msra.mxu0 0.0
        %566 = vmatprep.subr.mxu0 0.0
        %567 = vmatpush1.msra.mxu0 0.0
        %568 = vmatprep.subr.mxu0 0.0
        %569 = vmatpush1.msra.mxu0 0.0
        %570 = vmatprep.subr.mxu0 0.0
        %571 = vmatpush1.msra.mxu0 0.0
        %572 = vmatprep.subr.mxu0 0.0
        %573 = vmatpush1.msra.mxu0 0.0
        %574 = vmatprep.subr.mxu0 0.0
        %575 = vmatpush1.msra.mxu0 0.0
        %576 = vmatprep.subr.mxu0 0.0
        %577 = vmatpush1.msra.mxu0 0.0
        %578 = vmatprep.subr.mxu0 0.0
        %579 = vmatpush1.msra.mxu0 0.0
        %580 = vmatprep.subr.mxu0 0.0
        %581 = vmatpush1.msra.mxu0 0.0
        %582 = vmatprep.subr.mxu0 0.0
        %583 = vmatpush1.msra.mxu0 0.0
        %584 = vmatprep.subr.mxu0 0.0
        %585 = vmatpush1.msra.mxu0 0.0
        %586 = vmatprep.subr.mxu0 0.0
        %587 = vmatpush1.msra.mxu0 0.0
        %588 = vmatprep.subr.mxu0 0.0
        %589 = vmatpush1.msra.mxu0 0.0
        %590 = vmatprep.mubr.f32.mxu0 0.0
        %591 = vmatmul.mubr.f32.gmra.mrb[0].mxu0 %v522
        %v592 = vpop.f32.mrb[0].mxu0
        %v593 = vadd.f32 0.0, %v592
        %v594 = vpop.f32.mrb[0].mxu0
        %v595 = vadd.f32 0.0, %v594
        %596 = vmatprep.mubr.f32.mxu0 0.0
        %597 = vmatmul.mubr.f32.gmra.mrb[0].mxu0 %v524
        %v598 = vpop.f32.mrb[0].mxu0
        %v599 = vadd.f32 0.0, %v598
        %v600 = vpop.f32.mrb[0].mxu0
        %v601 = vadd.f32 0.0, %v600
        %602 = vdwg.mxu0
        %v603 = vadd.f32 %v492, %v593
        %v604 = vadd.f32 %v493, %v595
        %v605 = vadd.f32 %v494, %v599
        %v606 = vadd.f32 %v495, %v601
        %s607 = scalar_lea.vmem [#allocation2], 288
        %v608 = vld [vmem:[%s607] sm:$0xff]
        %v609 = vld [vmem:[%s607 + $0x8] sm:$0xff]
        %v610 = vld [vmem:[%s607 + $0x10] sm:$0xff]
        %v611 = vld [vmem:[%s607 + $0x18] sm:$0xff]
        %v612 = vld [vmem:[%s607 + $0x20] sm:$0xff]
        %v613 = vld [vmem:[%s607 + $0x28] sm:$0xff]
        %v614 = vld [vmem:[%s607 + $0x30] sm:$0xff]
        %v615 = vld [vmem:[%s607 + $0x38] sm:$0xff]
        %v616 = vld [vmem:[%s607 + $0x40] sm:$0xff]
        %v617 = vld [vmem:[%s607 + $0x48] sm:$0xff]
        %v618 = vld [vmem:[%s607 + $0x50] sm:$0xff]
        %v619 = vld [vmem:[%s607 + $0x58] sm:$0xff]
        %v620 = vld [vmem:[%s607 + $0x60] sm:$0xff]
        %v621 = vld [vmem:[%s607 + $0x68] sm:$0xff]
        %v622 = vld [vmem:[%s607 + $0x70] sm:$0xff]
        %v623 = vld [vmem:[%s607 + $0x78] sm:$0xff]
        %v624 = vld [vmem:[%s607 + $0x80] sm:$0xff]
        %v625 = vld [vmem:[%s607 + $0x88] sm:$0xff]
        %vm626 = vcmask 1045504
        %v627 = vrot.slane %v375, 2
        %v628 = vrot.slane %v376, 2
        %v629 = vsel %vm626, %v627, %v628
        %v630 = vrot.slane %v377, 2
        %v631 = vsel %vm626, %v628, %v630
        %v632 = vsel %vm397, %v629, 0
        %v634 = vsel %vm397, %v631, 0
        %636 = vmatprep.subr.mxu0 %v609
        %637 = vmatpush1.msra.mxu0 %v608
        %638 = vmatprep.subr.mxu0 %v611
        %639 = vmatpush1.msra.mxu0 %v610
        %640 = vmatprep.subr.mxu0 %v613
        %641 = vmatpush1.msra.mxu0 %v612
        %642 = vmatprep.subr.mxu0 %v615
        %643 = vmatpush1.msra.mxu0 %v614
        %644 = vmatprep.subr.mxu0 %v617
        %645 = vmatpush1.msra.mxu0 %v616
        %646 = vmatprep.subr.mxu0 %v619
        %647 = vmatpush1.msra.mxu0 %v618
        %648 = vmatprep.subr.mxu0 %v621
        %649 = vmatpush1.msra.mxu0 %v620
        %650 = vmatprep.subr.mxu0 %v623
        %651 = vmatpush1.msra.mxu0 %v622
        %652 = vmatprep.subr.mxu0 %v625
        %653 = vmatpush1.msra.mxu0 %v624
        %654 = vmatprep.subr.mxu0 0.0
        %655 = vmatpush1.msra.mxu0 0.0
        %656 = vmatprep.subr.mxu0 0.0
        %657 = vmatpush1.msra.mxu0 0.0
        %658 = vmatprep.subr.mxu0 0.0
        %659 = vmatpush1.msra.mxu0 0.0
        %660 = vmatprep.subr.mxu0 0.0
        %661 = vmatpush1.msra.mxu0 0.0
        %662 = vmatprep.subr.mxu0 0.0
        %663 = vmatpush1.msra.mxu0 0.0
        %664 = vmatprep.subr.mxu0 0.0
        %665 = vmatpush1.msra.mxu0 0.0
        %666 = vmatprep.subr.mxu0 0.0
        %667 = vmatpush1.msra.mxu0 0.0
        %668 = vmatprep.subr.mxu0 0.0
        %669 = vmatpush1.msra.mxu0 0.0
        %670 = vmatprep.subr.mxu0 0.0
        %671 = vmatpush1.msra.mxu0 0.0
        %672 = vmatprep.subr.mxu0 0.0
        %673 = vmatpush1.msra.mxu0 0.0
        %674 = vmatprep.subr.mxu0 0.0
        %675 = vmatpush1.msra.mxu0 0.0
        %676 = vmatprep.subr.mxu0 0.0
        %677 = vmatpush1.msra.mxu0 0.0
        %678 = vmatprep.subr.mxu0 0.0
        %679 = vmatpush1.msra.mxu0 0.0
        %680 = vmatprep.subr.mxu0 0.0
        %681 = vmatpush1.msra.mxu0 0.0
        %682 = vmatprep.subr.mxu0 0.0
        %683 = vmatpush1.msra.mxu0 0.0
        %684 = vmatprep.subr.mxu0 0.0
        %685 = vmatpush1.msra.mxu0 0.0
        %686 = vmatprep.subr.mxu0 0.0
        %687 = vmatpush1.msra.mxu0 0.0
        %688 = vmatprep.subr.mxu0 0.0
        %689 = vmatpush1.msra.mxu0 0.0
        %690 = vmatprep.subr.mxu0 0.0
        %691 = vmatpush1.msra.mxu0 0.0
        %692 = vmatprep.subr.mxu0 0.0
        %693 = vmatpush1.msra.mxu0 0.0
        %694 = vmatprep.subr.mxu0 0.0
        %695 = vmatpush1.msra.mxu0 0.0
        %696 = vmatprep.subr.mxu0 0.0
        %697 = vmatpush1.msra.mxu0 0.0
        %698 = vmatprep.subr.mxu0 0.0
        %699 = vmatpush1.msra.mxu0 0.0
        %700 = vmatprep.mubr.f32.mxu0 0.0
        %701 = vmatmul.mubr.f32.gmra.mrb[0].mxu0 %v632
        %v702 = vpop.f32.mrb[0].mxu0
        %v703 = vadd.f32 0.0, %v702
        %v704 = vpop.f32.mrb[0].mxu0
        %v705 = vadd.f32 0.0, %v704
        %706 = vmatprep.mubr.f32.mxu0 0.0
        %707 = vmatmul.mubr.f32.gmra.mrb[0].mxu0 %v634
        %v708 = vpop.f32.mrb[0].mxu0
        %v709 = vadd.f32 0.0, %v708
        %v710 = vpop.f32.mrb[0].mxu0
        %v711 = vadd.f32 0.0, %v710
        %712 = vdwg.mxu0
        %v713 = vadd.f32 %v603, %v703
        %v714 = vadd.f32 %v604, %v705
        %v715 = vadd.f32 %v605, %v709
        %v716 = vadd.f32 %v606, %v711
        %v717 = vmax.f32 %v713, 0.0
        %v718 = vmax.f32 %v714, 0.0
        %v719 = vmax.f32 %v715, 0.0
        %v720 = vmax.f32 %v716, 0.0
        %v721 = vld [vmem:[#allocation4] sm:$0xff]
        %v722 = vld [vmem:[#allocation4 + $0x8] sm:$0xff]
        %v723 = vld [vmem:[#allocation4 + $0x10] sm:$0xff]
        %v724 = vld [vmem:[#allocation4 + $0x18] sm:$0xff]
        %v725 = vld [vmem:[#allocation4 + $0x20] sm:$0xff]
        %v726 = vld [vmem:[#allocation4 + $0x28] sm:$0xff]
        %v727 = vld [vmem:[#allocation4 + $0x30] sm:$0xff]
        %v728 = vld [vmem:[#allocation4 + $0x38] sm:$0xff]
        %v729 = vld [vmem:[#allocation4 + $0x40] sm:$0xff]
        %v730 = vld [vmem:[#allocation4 + $0x48] sm:$0xff]
        %v731 = vld [vmem:[#allocation4 + $0x50] sm:$0xff]
        %v732 = vld [vmem:[#allocation4 + $0x58] sm:$0xff]
        %v733 = vld [vmem:[#allocation4 + $0x60] sm:$0xff]
        %v734 = vld [vmem:[#allocation4 + $0x68] sm:$0xff]
        %v735 = vld [vmem:[#allocation4 + $0x70] sm:$0xff]
        %v736 = vld [vmem:[#allocation4 + $0x78] sm:$0xff]
        %v737 = vld [vmem:[#allocation4 + $0x80] sm:$0xff]
        %v738 = vld [vmem:[#allocation4 + $0x88] sm:$0xff]
        %v739 = vld [vmem:[#allocation4 + $0x90] sm:$0xff]
        %v740 = vld [vmem:[#allocation4 + $0x98] sm:$0xff]
        %v741 = vld [vmem:[#allocation4 + $0xa0] sm:$0xff]
        %v742 = vld [vmem:[#allocation4 + $0xa8] sm:$0xff]
        %v743 = vld [vmem:[#allocation4 + $0xb0] sm:$0xff]
        %v744 = vld [vmem:[#allocation4 + $0xb8] sm:$0xff]
        %v745 = vld [vmem:[#allocation4 + $0xc0] sm:$0xff]
        %v746 = vld [vmem:[#allocation4 + $0xc8] sm:$0xff]
        %v747 = vld [vmem:[#allocation4 + $0xd0] sm:$0xff]
        %v748 = vld [vmem:[#allocation4 + $0xd8] sm:$0xff]
        %v749 = vld [vmem:[#allocation4 + $0xe0] sm:$0xff]
        %v750 = vld [vmem:[#allocation4 + $0xe8] sm:$0xff]
        %v751 = vld [vmem:[#allocation4 + $0xf0] sm:$0xff]
        %v752 = vld [vmem:[#allocation4 + $0xf8] sm:$0xff]
        %v753 = vld [vmem:[#allocation4 + $0x100] sm:$0xff]
        %v754 = vld [vmem:[#allocation4 + $0x108] sm:$0xff]
        %v755 = vld [vmem:[#allocation4 + $0x110] sm:$0xff]
        %v756 = vld [vmem:[#allocation4 + $0x118] sm:$0xff]
        %v757 = vld [vmem:[#allocation4 + $0x120] sm:$0xff]
        %v758 = vld [vmem:[#allocation4 + $0x128] sm:$0xff]
        %v759 = vld [vmem:[#allocation4 + $0x130] sm:$0xff]
        %v760 = vld [vmem:[#allocation4 + $0x138] sm:$0xff]
        %v761 = vld [vmem:[#allocation4 + $0x140] sm:$0xff]
        %v762 = vld [vmem:[#allocation4 + $0x148] sm:$0xff]
        %v763 = vld [vmem:[#allocation4 + $0x150] sm:$0xff]
        %v764 = vld [vmem:[#allocation4 + $0x158] sm:$0xff]
        %v765 = vld [vmem:[#allocation4 + $0x160] sm:$0xff]
        %v766 = vld [vmem:[#allocation4 + $0x168] sm:$0xff]
        %v767 = vld [vmem:[#allocation4 + $0x170] sm:$0xff]
        %v768 = vld [vmem:[#allocation4 + $0x178] sm:$0xff]
        %v769 = vld [vmem:[#allocation4 + $0x180] sm:$0xff]
        %v770 = vld [vmem:[#allocation4 + $0x188] sm:$0xff]
        %v771 = vld [vmem:[#allocation4 + $0x190] sm:$0xff]
        %v772 = vld [vmem:[#allocation4 + $0x198] sm:$0xff]
        %v773 = vld [vmem:[#allocation4 + $0x1a0] sm:$0xff]
        %v774 = vld [vmem:[#allocation4 + $0x1a8] sm:$0xff]
        %v775 = vld [vmem:[#allocation4 + $0x1b0] sm:$0xff]
        %v776 = vld [vmem:[#allocation4 + $0x1b8] sm:$0xff]
        %v777 = vld [vmem:[#allocation4 + $0x1c0] sm:$0xff]
        %v778 = vld [vmem:[#allocation4 + $0x1c8] sm:$0xff]
        %v779 = vld [vmem:[#allocation4 + $0x1d0] sm:$0xff]
        %v780 = vld [vmem:[#allocation4 + $0x1d8] sm:$0xff]
        %v781 = vld [vmem:[#allocation4 + $0x1e0] sm:$0xff]
        %v782 = vld [vmem:[#allocation4 + $0x1e8] sm:$0xff]
        %v783 = vld [vmem:[#allocation4 + $0x1f0] sm:$0xff]
        %v784 = vld [vmem:[#allocation4 + $0x1f8] sm:$0xff]
        %785 = vmatprep.subr.mxu0 %v722
        %786 = vmatpush1.msra.mxu0 %v721
        %787 = vmatprep.subr.mxu0 %v724
        %788 = vmatpush1.msra.mxu0 %v723
        %789 = vmatprep.subr.mxu0 %v726
        %790 = vmatpush1.msra.mxu0 %v725
        %791 = vmatprep.subr.mxu0 %v728
        %792 = vmatpush1.msra.mxu0 %v727
        %793 = vmatprep.subr.mxu0 %v730
        %794 = vmatpush1.msra.mxu0 %v729
        %795 = vmatprep.subr.mxu0 %v732
        %796 = vmatpush1.msra.mxu0 %v731
        %797 = vmatprep.subr.mxu0 %v734
        %798 = vmatpush1.msra.mxu0 %v733
        %799 = vmatprep.subr.mxu0 %v736
        %800 = vmatpush1.msra.mxu0 %v735
        %801 = vmatprep.subr.mxu0 %v738
        %802 = vmatpush1.msra.mxu0 %v737
        %803 = vmatprep.subr.mxu0 %v740
        %804 = vmatpush1.msra.mxu0 %v739
        %805 = vmatprep.subr.mxu0 %v742
        %806 = vmatpush1.msra.mxu0 %v741
        %807 = vmatprep.subr.mxu0 %v744
        %808 = vmatpush1.msra.mxu0 %v743
        %809 = vmatprep.subr.mxu0 %v746
        %810 = vmatpush1.msra.mxu0 %v745
        %811 = vmatprep.subr.mxu0 %v748
        %812 = vmatpush1.msra.mxu0 %v747
        %813 = vmatprep.subr.mxu0 %v750
        %814 = vmatpush1.msra.mxu0 %v749
        %815 = vmatprep.subr.mxu0 %v752
        %816 = vmatpush1.msra.mxu0 %v751
        %817 = vmatprep.subr.mxu0 %v754
        %818 = vmatpush1.msra.mxu0 %v753
        %819 = vmatprep.subr.mxu0 %v756
        %820 = vmatpush1.msra.mxu0 %v755
        %821 = vmatprep.subr.mxu0 %v758
        %822 = vmatpush1.msra.mxu0 %v757
        %823 = vmatprep.subr.mxu0 %v760
        %824 = vmatpush1.msra.mxu0 %v759
        %825 = vmatprep.subr.mxu0 %v762
        %826 = vmatpush1.msra.mxu0 %v761
        %827 = vmatprep.subr.mxu0 %v764
        %828 = vmatpush1.msra.mxu0 %v763
        %829 = vmatprep.subr.mxu0 %v766
        %830 = vmatpush1.msra.mxu0 %v765
        %831 = vmatprep.subr.mxu0 %v768
        %832 = vmatpush1.msra.mxu0 %v767
        %833 = vmatprep.subr.mxu0 %v770
        %834 = vmatpush1.msra.mxu0 %v769
        %835 = vmatprep.subr.mxu0 %v772
        %836 = vmatpush1.msra.mxu0 %v771
        %837 = vmatprep.subr.mxu0 %v774
        %838 = vmatpush1.msra.mxu0 %v773
        %839 = vmatprep.subr.mxu0 %v776
        %840 = vmatpush1.msra.mxu0 %v775
        %841 = vmatprep.subr.mxu0 %v778
        %842 = vmatpush1.msra.mxu0 %v777
        %843 = vmatprep.subr.mxu0 %v780
        %844 = vmatpush1.msra.mxu0 %v779
        %845 = vmatprep.subr.mxu0 %v782
        %846 = vmatpush1.msra.mxu0 %v781
        %847 = vmatprep.subr.mxu0 %v784
        %848 = vmatpush1.msra.mxu0 %v783
        %849 = vmatprep.mubr.f32.mxu0 %v718
        %850 = vmatmul.mubr.f32.gmra.mrb[0].mxu0 %v717
        %v851 = vpop.f32.mrb[0].mxu0
        %v852 = vadd.f32 0.0, %v851
        %v853 = vpop.f32.mrb[0].mxu0
        %v854 = vadd.f32 0.0, %v853
        %855 = vmatprep.mubr.f32.mxu0 %v720
        %856 = vmatmul.mubr.f32.gmra.mrb[0].mxu0 %v719
        %v857 = vpop.f32.mrb[0].mxu0
        %v858 = vadd.f32 0.0, %v857
        %v859 = vpop.f32.mrb[0].mxu0
        %v860 = vadd.f32 0.0, %v859
        %861 = vdwg.mxu0
        %s862 = scalar_lea.vmem [#allocation4], 512
        %v863 = vld [vmem:[%s862] sm:$0xff]
        %v864 = vld [vmem:[%s862 + $0x8] sm:$0xff]
        %v865 = vld [vmem:[%s862 + $0x10] sm:$0xff]
        %v866 = vld [vmem:[%s862 + $0x18] sm:$0xff]
        %v867 = vld [vmem:[%s862 + $0x20] sm:$0xff]
        %v868 = vld [vmem:[%s862 + $0x28] sm:$0xff]
        %v869 = vld [vmem:[%s862 + $0x30] sm:$0xff]
        %v870 = vld [vmem:[%s862 + $0x38] sm:$0xff]
        %v871 = vld [vmem:[%s862 + $0x40] sm:$0xff]
        %v872 = vld [vmem:[%s862 + $0x48] sm:$0xff]
        %v873 = vld [vmem:[%s862 + $0x50] sm:$0xff]
        %v874 = vld [vmem:[%s862 + $0x58] sm:$0xff]
        %v875 = vld [vmem:[%s862 + $0x60] sm:$0xff]
        %v876 = vld [vmem:[%s862 + $0x68] sm:$0xff]
        %v877 = vld [vmem:[%s862 + $0x70] sm:$0xff]
        %v878 = vld [vmem:[%s862 + $0x78] sm:$0xff]
        %v879 = vld [vmem:[%s862 + $0x80] sm:$0xff]
        %v880 = vld [vmem:[%s862 + $0x88] sm:$0xff]
        %v881 = vld [vmem:[%s862 + $0x90] sm:$0xff]
        %v882 = vld [vmem:[%s862 + $0x98] sm:$0xff]
        %v883 = vld [vmem:[%s862 + $0xa0] sm:$0xff]
        %v884 = vld [vmem:[%s862 + $0xa8] sm:$0xff]
        %v885 = vld [vmem:[%s862 + $0xb0] sm:$0xff]
        %v886 = vld [vmem:[%s862 + $0xb8] sm:$0xff]
        %v887 = vld [vmem:[%s862 + $0xc0] sm:$0xff]
        %v888 = vld [vmem:[%s862 + $0xc8] sm:$0xff]
        %v889 = vld [vmem:[%s862 + $0xd0] sm:$0xff]
        %v890 = vld [vmem:[%s862 + $0xd8] sm:$0xff]
        %v891 = vld [vmem:[%s862 + $0xe0] sm:$0xff]
        %v892 = vld [vmem:[%s862 + $0xe8] sm:$0xff]
        %v893 = vld [vmem:[%s862 + $0xf0] sm:$0xff]
        %v894 = vld [vmem:[%s862 + $0xf8] sm:$0xff]
        %v895 = vld [vmem:[%s862 + $0x100] sm:$0xff]
        %v896 = vld [vmem:[%s862 + $0x108] sm:$0xff]
        %v897 = vld [vmem:[%s862 + $0x110] sm:$0xff]
        %v898 = vld [vmem:[%s862 + $0x118] sm:$0xff]
        %v899 = vld [vmem:[%s862 + $0x120] sm:$0xff]
        %v900 = vld [vmem:[%s862 + $0x128] sm:$0xff]
        %v901 = vld [vmem:[%s862 + $0x130] sm:$0xff]
        %v902 = vld [vmem:[%s862 + $0x138] sm:$0xff]
        %v903 = vld [vmem:[%s862 + $0x140] sm:$0xff]
        %v904 = vld [vmem:[%s862 + $0x148] sm:$0xff]
        %v905 = vld [vmem:[%s862 + $0x150] sm:$0xff]
        %v906 = vld [vmem:[%s862 + $0x158] sm:$0xff]
        %v907 = vld [vmem:[%s862 + $0x160] sm:$0xff]
        %v908 = vld [vmem:[%s862 + $0x168] sm:$0xff]
        %v909 = vld [vmem:[%s862 + $0x170] sm:$0xff]
        %v910 = vld [vmem:[%s862 + $0x178] sm:$0xff]
        %v911 = vld [vmem:[%s862 + $0x180] sm:$0xff]
        %v912 = vld [vmem:[%s862 + $0x188] sm:$0xff]
        %v913 = vld [vmem:[%s862 + $0x190] sm:$0xff]
        %v914 = vld [vmem:[%s862 + $0x198] sm:$0xff]
        %v915 = vld [vmem:[%s862 + $0x1a0] sm:$0xff]
        %v916 = vld [vmem:[%s862 + $0x1a8] sm:$0xff]
        %v917 = vld [vmem:[%s862 + $0x1b0] sm:$0xff]
        %v918 = vld [vmem:[%s862 + $0x1b8] sm:$0xff]
        %v919 = vld [vmem:[%s862 + $0x1c0] sm:$0xff]
        %v920 = vld [vmem:[%s862 + $0x1c8] sm:$0xff]
        %v921 = vld [vmem:[%s862 + $0x1d0] sm:$0xff]
        %v922 = vld [vmem:[%s862 + $0x1d8] sm:$0xff]
        %v923 = vld [vmem:[%s862 + $0x1e0] sm:$0xff]
        %v924 = vld [vmem:[%s862 + $0x1e8] sm:$0xff]
        %v925 = vld [vmem:[%s862 + $0x1f0] sm:$0xff]
        %v926 = vld [vmem:[%s862 + $0x1f8] sm:$0xff]
        %927 = vmatprep.subr.mxu0 %v864
        %928 = vmatpush1.msra.mxu0 %v863
        %929 = vmatprep.subr.mxu0 %v866
        %930 = vmatpush1.msra.mxu0 %v865
        %931 = vmatprep.subr.mxu0 %v868
        %932 = vmatpush1.msra.mxu0 %v867
        %933 = vmatprep.subr.mxu0 %v870
        %934 = vmatpush1.msra.mxu0 %v869
        %935 = vmatprep.subr.mxu0 %v872
        %936 = vmatpush1.msra.mxu0 %v871
        %937 = vmatprep.subr.mxu0 %v874
        %938 = vmatpush1.msra.mxu0 %v873
        %939 = vmatprep.subr.mxu0 %v876
        %940 = vmatpush1.msra.mxu0 %v875
        %941 = vmatprep.subr.mxu0 %v878
        %942 = vmatpush1.msra.mxu0 %v877
        %943 = vmatprep.subr.mxu0 %v880
        %944 = vmatpush1.msra.mxu0 %v879
        %945 = vmatprep.subr.mxu0 %v882
        %946 = vmatpush1.msra.mxu0 %v881
        %947 = vmatprep.subr.mxu0 %v884
        %948 = vmatpush1.msra.mxu0 %v883
        %949 = vmatprep.subr.mxu0 %v886
        %950 = vmatpush1.msra.mxu0 %v885
        %951 = vmatprep.subr.mxu0 %v888
        %952 = vmatpush1.msra.mxu0 %v887
        %953 = vmatprep.subr.mxu0 %v890
        %954 = vmatpush1.msra.mxu0 %v889
        %955 = vmatprep.subr.mxu0 %v892
        %956 = vmatpush1.msra.mxu0 %v891
        %957 = vmatprep.subr.mxu0 %v894
        %958 = vmatpush1.msra.mxu0 %v893
        %959 = vmatprep.subr.mxu0 %v896
        %960 = vmatpush1.msra.mxu0 %v895
        %961 = vmatprep.subr.mxu0 %v898
        %962 = vmatpush1.msra.mxu0 %v897
        %963 = vmatprep.subr.mxu0 %v900
        %964 = vmatpush1.msra.mxu0 %v899
        %965 = vmatprep.subr.mxu0 %v902
        %966 = vmatpush1.msra.mxu0 %v901
        %967 = vmatprep.subr.mxu0 %v904
        %968 = vmatpush1.msra.mxu0 %v903
        %969 = vmatprep.subr.mxu0 %v906
        %970 = vmatpush1.msra.mxu0 %v905
        %971 = vmatprep.subr.mxu0 %v908
        %972 = vmatpush1.msra.mxu0 %v907
        %973 = vmatprep.subr.mxu0 %v910
        %974 = vmatpush1.msra.mxu0 %v909
        %975 = vmatprep.subr.mxu0 %v912
        %976 = vmatpush1.msra.mxu0 %v911
        %977 = vmatprep.subr.mxu0 %v914
        %978 = vmatpush1.msra.mxu0 %v913
        %979 = vmatprep.subr.mxu0 %v916
        %980 = vmatpush1.msra.mxu0 %v915
        %981 = vmatprep.subr.mxu0 %v918
        %982 = vmatpush1.msra.mxu0 %v917
        %983 = vmatprep.subr.mxu0 %v920
        %984 = vmatpush1.msra.mxu0 %v919
        %985 = vmatprep.subr.mxu0 %v922
        %986 = vmatpush1.msra.mxu0 %v921
        %987 = vmatprep.subr.mxu0 %v924
        %988 = vmatpush1.msra.mxu0 %v923
        %989 = vmatprep.subr.mxu0 %v926
        %990 = vmatpush1.msra.mxu0 %v925
        %991 = vmatprep.mubr.f32.mxu0 %v718
        %992 = vmatmul.mubr.f32.gmra.mrb[0].mxu0 %v717
        %v993 = vpop.f32.mrb[0].mxu0
        %v994 = vadd.f32 0.0, %v993
        %v995 = vpop.f32.mrb[0].mxu0
        %v996 = vadd.f32 0.0, %v995
        %997 = vmatprep.mubr.f32.mxu0 %v720
        %998 = vmatmul.mubr.f32.gmra.mrb[0].mxu0 %v719
        %v999 = vpop.f32.mrb[0].mxu0
        %v1000 = vadd.f32 0.0, %v999
        %v1001 = vpop.f32.mrb[0].mxu0
        %v1002 = vadd.f32 0.0, %v1001
        %1003 = vdwg.mxu0
        %v1004 = vmax.f32 %v852, %v994
        %v1005 = vmax.f32 %v854, %v996
        %v1006 = vmax.f32 %v858, %v1000
        %v1007 = vmax.f32 %v860, %v1002
        %v1008 = vld [vmem:[%s4] sm:$0xff]
        %v1009 = vld [vmem:[%s4 + $0x8] sm:$0x3]
        %vm1010 = vcmask 130048
        %v1012 = vsel %vm1010, %v1008, 0
        %v1015 = vsel %vm1010, %v1009, 0
        %1017 = vmatprep.subr.mxu0 %v1005
        %1018 = vmatpush1.msra.mxu0 %v1004
        %1019 = vmatprep.subr.mxu0 %v1007
        %1020 = vmatpush1.msra.mxu0 %v1006
        %1021 = vmatprep.subr.mxu0 0.0
        %1022 = vmatpush1.msra.mxu0 0.0
        %1023 = vmatprep.subr.mxu0 0.0
        %1024 = vmatpush1.msra.mxu0 0.0
        %1025 = vmatprep.subr.mxu0 0.0
        %1026 = vmatpush1.msra.mxu0 0.0
        %1027 = vmatprep.subr.mxu0 0.0
        %1028 = vmatpush1.msra.mxu0 0.0
        %1029 = vmatprep.subr.mxu0 0.0
        %1030 = vmatpush1.msra.mxu0 0.0
        %1031 = vmatprep.subr.mxu0 0.0
        %1032 = vmatpush1.msra.mxu0 0.0
        %1033 = vmatprep.subr.mxu0 0.0
        %1034 = vmatpush1.msra.mxu0 0.0
        %1035 = vmatprep.subr.mxu0 0.0
        %1036 = vmatpush1.msra.mxu0 0.0
        %1037 = vmatprep.subr.mxu0 0.0
        %1038 = vmatpush1.msra.mxu0 0.0
        %1039 = vmatprep.subr.mxu0 0.0
        %1040 = vmatpush1.msra.mxu0 0.0
        %1041 = vmatprep.subr.mxu0 0.0
        %1042 = vmatpush1.msra.mxu0 0.0
        %1043 = vmatprep.subr.mxu0 0.0
        %1044 = vmatpush1.msra.mxu0 0.0
        %1045 = vmatprep.subr.mxu0 0.0
        %1046 = vmatpush1.msra.mxu0 0.0
        %1047 = vmatprep.subr.mxu0 0.0
        %1048 = vmatpush1.msra.mxu0 0.0
        %1049 = vmatprep.subr.mxu0 0.0
        %1050 = vmatpush1.msra.mxu0 0.0
        %1051 = vmatprep.subr.mxu0 0.0
        %1052 = vmatpush1.msra.mxu0 0.0
        %1053 = vmatprep.subr.mxu0 0.0
        %1054 = vmatpush1.msra.mxu0 0.0
        %1055 = vmatprep.subr.mxu0 0.0
        %1056 = vmatpush1.msra.mxu0 0.0
        %1057 = vmatprep.subr.mxu0 0.0
        %1058 = vmatpush1.msra.mxu0 0.0
        %1059 = vmatprep.subr.mxu0 0.0
        %1060 = vmatpush1.msra.mxu0 0.0
        %1061 = vmatprep.subr.mxu0 0.0
        %1062 = vmatpush1.msra.mxu0 0.0
        %1063 = vmatprep.subr.mxu0 0.0
        %1064 = vmatpush1.msra.mxu0 0.0
        %1065 = vmatprep.subr.mxu0 0.0
        %1066 = vmatpush1.msra.mxu0 0.0
        %1067 = vmatprep.subr.mxu0 0.0
        %1068 = vmatpush1.msra.mxu0 0.0
        %1069 = vmatprep.subr.mxu0 0.0
        %1070 = vmatpush1.msra.mxu0 0.0
        %1071 = vmatprep.subr.mxu0 0.0
        %1072 = vmatpush1.msra.mxu0 0.0
        %1073 = vmatprep.subr.mxu0 0.0
        %1074 = vmatpush1.msra.mxu0 0.0
        %1075 = vmatprep.subr.mxu0 0.0
        %1076 = vmatpush1.msra.mxu0 0.0
        %1077 = vmatprep.subr.mxu0 0.0
        %1078 = vmatpush1.msra.mxu0 0.0
        %1079 = vmatprep.subr.mxu0 0.0
        %1080 = vmatpush1.msra.mxu0 0.0
        %1081 = vmatprep.mubr.f32.mxu0 0.0
        %1082 = vmatmul.mubr.f32.gmra.mrb[0].mxu0 %v1012
        %v1083 = vpop.f32.mrb[0].mxu0
        %v1084 = vadd.f32 0.0, %v1083
        %v1085 = vpop.f32.mrb[0].mxu0
        %v1086 = vadd.f32 0.0, %v1085
        %1087 = vmatprep.mubr.f32.mxu0 0.0
        %1088 = vmatmul.mubr.f32.gmra.mrb[0].mxu0 %v1015
        %v1089 = vpop.f32.mrb[0].mxu0
        %v1090 = vadd.f32 0.0, %v1089
        %v1091 = vpop.f32.mrb[0].mxu0
        %v1092 = vadd.f32 0.0, %v1091
        %1093 = vdwg.mxu0
        %s1094 = scalar_lea.vmem %s4, 16
        %v1095 = vld [vmem:[%s1094] sm:$0xff]
        %v1096 = vld [vmem:[%s1094 + $0x8] sm:$0x3]
        %v1098 = vsel %vm1010, %v1095, 0
        %v1101 = vsel %vm1010, %v1096, 0
        %1103 = vmatprep.subr.mxu0 %v1005
        %1104 = vmatpush1.msra.mxu0 %v1004
        %1105 = vmatprep.subr.mxu0 %v1007
        %1106 = vmatpush1.msra.mxu0 %v1006
        %1107 = vmatprep.subr.mxu0 0.0
        %1108 = vmatpush1.msra.mxu0 0.0
        %1109 = vmatprep.subr.mxu0 0.0
        %1110 = vmatpush1.msra.mxu0 0.0
        %1111 = vmatprep.subr.mxu0 0.0
        %1112 = vmatpush1.msra.mxu0 0.0
        %1113 = vmatprep.subr.mxu0 0.0
        %1114 = vmatpush1.msra.mxu0 0.0
        %1115 = vmatprep.subr.mxu0 0.0
        %1116 = vmatpush1.msra.mxu0 0.0
        %1117 = vmatprep.subr.mxu0 0.0
        %1118 = vmatpush1.msra.mxu0 0.0
        %1119 = vmatprep.subr.mxu0 0.0
        %1120 = vmatpush1.msra.mxu0 0.0
        %1121 = vmatprep.subr.mxu0 0.0
        %1122 = vmatpush1.msra.mxu0 0.0
        %1123 = vmatprep.subr.mxu0 0.0
        %1124 = vmatpush1.msra.mxu0 0.0
        %1125 = vmatprep.subr.mxu0 0.0
        %1126 = vmatpush1.msra.mxu0 0.0
        %1127 = vmatprep.subr.mxu0 0.0
        %1128 = vmatpush1.msra.mxu0 0.0
        %1129 = vmatprep.subr.mxu0 0.0
        %1130 = vmatpush1.msra.mxu0 0.0
        %1131 = vmatprep.subr.mxu0 0.0
        %1132 = vmatpush1.msra.mxu0 0.0
        %1133 = vmatprep.subr.mxu0 0.0
        %1134 = vmatpush1.msra.mxu0 0.0
        %1135 = vmatprep.subr.mxu0 0.0
        %1136 = vmatpush1.msra.mxu0 0.0
        %1137 = vmatprep.subr.mxu0 0.0
        %1138 = vmatpush1.msra.mxu0 0.0
        %1139 = vmatprep.subr.mxu0 0.0
        %1140 = vmatpush1.msra.mxu0 0.0
        %1141 = vmatprep.subr.mxu0 0.0
        %1142 = vmatpush1.msra.mxu0 0.0
        %1143 = vmatprep.subr.mxu0 0.0
        %1144 = vmatpush1.msra.mxu0 0.0
        %1145 = vmatprep.subr.mxu0 0.0
        %1146 = vmatpush1.msra.mxu0 0.0
        %1147 = vmatprep.subr.mxu0 0.0
        %1148 = vmatpush1.msra.mxu0 0.0
        %1149 = vmatprep.subr.mxu0 0.0
        %1150 = vmatpush1.msra.mxu0 0.0
        %1151 = vmatprep.subr.mxu0 0.0
        %1152 = vmatpush1.msra.mxu0 0.0
        %1153 = vmatprep.subr.mxu0 0.0
        %1154 = vmatpush1.msra.mxu0 0.0
        %1155 = vmatprep.subr.mxu0 0.0
        %1156 = vmatpush1.msra.mxu0 0.0
        %1157 = vmatprep.subr.mxu0 0.0
        %1158 = vmatpush1.msra.mxu0 0.0
        %1159 = vmatprep.subr.mxu0 0.0
        %1160 = vmatpush1.msra.mxu0 0.0
        %1161 = vmatprep.subr.mxu0 0.0
        %1162 = vmatpush1.msra.mxu0 0.0
        %1163 = vmatprep.subr.mxu0 0.0
        %1164 = vmatpush1.msra.mxu0 0.0
        %1165 = vmatprep.subr.mxu0 0.0
        %1166 = vmatpush1.msra.mxu0 0.0
        %1167 = vmatprep.mubr.f32.mxu0 0.0
        %1168 = vmatmul.mubr.f32.gmra.mrb[0].mxu0 %v1098
        %v1169 = vpop.f32.mrb[0].mxu0
        %v1170 = vadd.f32 0.0, %v1169
        %v1171 = vpop.f32.mrb[0].mxu0
        %v1172 = vadd.f32 0.0, %v1171
        %1173 = vmatprep.mubr.f32.mxu0 0.0
        %1174 = vmatmul.mubr.f32.gmra.mrb[0].mxu0 %v1101
        %v1175 = vpop.f32.mrb[0].mxu0
        %v1176 = vadd.f32 0.0, %v1175
        %v1177 = vpop.f32.mrb[0].mxu0
        %v1178 = vadd.f32 0.0, %v1177
        %1179 = vdwg.mxu0
        %v1180 = vmax.f32 %v1084, %v1170
        %v1181 = vmax.f32 %v1086, %v1172
        %v1182 = vmax.f32 %v1090, %v1176
        %v1183 = vmax.f32 %v1092, %v1178
        %v1184 = vld [vmem:[%s6] sm:$0x3]
        %v1185 = vld [vmem:[#allocation6] sm:$0xff]
        %v1186 = vld [vmem:[#allocation6 + $0x8] sm:$0xff]
        %v1187 = vld [vmem:[#allocation6 + $0x10] sm:$0xff]
        %v1188 = vld [vmem:[#allocation6 + $0x18] sm:$0xff]
        %v1189 = vld [vmem:[#allocation6 + $0x20] sm:$0xff]
        %v1190 = vld [vmem:[#allocation6 + $0x28] sm:$0xff]
        %v1191 = vld [vmem:[#allocation6 + $0x30] sm:$0xff]
        %v1192 = vld [vmem:[#allocation6 + $0x38] sm:$0xff]
        %v1193 = vld [vmem:[#allocation6 + $0x40] sm:$0xff]
        %v1194 = vld [vmem:[#allocation6 + $0x48] sm:$0xff]
        %v1195 = vld [vmem:[#allocation6 + $0x50] sm:$0xff]
        %v1196 = vld [vmem:[#allocation6 + $0x58] sm:$0xff]
        %v1197 = vld [vmem:[#allocation6 + $0x60] sm:$0xff]
        %v1198 = vld [vmem:[#allocation6 + $0x68] sm:$0xff]
        %v1199 = vld [vmem:[#allocation6 + $0x70] sm:$0xff]
        %v1200 = vld [vmem:[#allocation6 + $0x78] sm:$0xff]
        %v1201 = vld [vmem:[#allocation6 + $0x80] sm:$0xff]
        %v1202 = vld [vmem:[#allocation6 + $0x88] sm:$0xff]
        %v1203 = vld [vmem:[#allocation6 + $0x90] sm:$0xff]
        %v1204 = vld [vmem:[#allocation6 + $0x98] sm:$0xff]
        %v1205 = vld [vmem:[#allocation6 + $0xa0] sm:$0xff]
        %v1206 = vld [vmem:[#allocation6 + $0xa8] sm:$0xff]
        %v1207 = vld [vmem:[#allocation6 + $0xb0] sm:$0xff]
        %v1208 = vld [vmem:[#allocation6 + $0xb8] sm:$0xff]
        %v1209 = vld [vmem:[#allocation6 + $0xc0] sm:$0xff]
        %v1210 = vld [vmem:[#allocation6 + $0xc8] sm:$0xff]
        %v1211 = vld [vmem:[#allocation6 + $0xd0] sm:$0xff]
        %v1212 = vld [vmem:[#allocation6 + $0xd8] sm:$0xff]
        %v1213 = vld [vmem:[#allocation6 + $0xe0] sm:$0xff]
        %v1214 = vld [vmem:[#allocation6 + $0xe8] sm:$0xff]
        %v1215 = vld [vmem:[#allocation6 + $0xf0] sm:$0xff]
        %v1216 = vld [vmem:[#allocation6 + $0xf8] sm:$0xff]
        %v1217 = vld [vmem:[#allocation6 + $0x100] sm:$0xff]
        %v1218 = vld [vmem:[#allocation6 + $0x108] sm:$0xff]
        %v1219 = vld [vmem:[#allocation6 + $0x110] sm:$0xff]
        %v1220 = vld [vmem:[#allocation6 + $0x118] sm:$0xff]
        %v1221 = vld [vmem:[#allocation6 + $0x120] sm:$0xff]
        %v1222 = vld [vmem:[#allocation6 + $0x128] sm:$0xff]
        %v1223 = vld [vmem:[#allocation6 + $0x130] sm:$0xff]
        %v1224 = vld [vmem:[#allocation6 + $0x138] sm:$0xff]
        %vm1225 = vcmask 261120
        %v1227 = vsel %vm1225, %v1181, 0
        %1229 = vmatprep.subr.mxu0 %v1186
        %1230 = vmatpush1.msra.mxu0 %v1185
        %1231 = vmatprep.subr.mxu0 %v1188
        %1232 = vmatpush1.msra.mxu0 %v1187
        %1233 = vmatprep.subr.mxu0 %v1190
        %1234 = vmatpush1.msra.mxu0 %v1189
        %1235 = vmatprep.subr.mxu0 %v1192
        %1236 = vmatpush1.msra.mxu0 %v1191
        %1237 = vmatprep.subr.mxu0 %v1194
        %1238 = vmatpush1.msra.mxu0 %v1193
        %1239 = vmatprep.subr.mxu0 %v1196
        %1240 = vmatpush1.msra.mxu0 %v1195
        %1241 = vmatprep.subr.mxu0 %v1198
        %1242 = vmatpush1.msra.mxu0 %v1197
        %1243 = vmatprep.subr.mxu0 %v1200
        %1244 = vmatpush1.msra.mxu0 %v1199
        %1245 = vmatprep.subr.mxu0 %v1202
        %1246 = vmatpush1.msra.mxu0 %v1201
        %1247 = vmatprep.subr.mxu0 %v1204
        %1248 = vmatpush1.msra.mxu0 %v1203
        %1249 = vmatprep.subr.mxu0 %v1206
        %1250 = vmatpush1.msra.mxu0 %v1205
        %1251 = vmatprep.subr.mxu0 %v1208
        %1252 = vmatpush1.msra.mxu0 %v1207
        %1253 = vmatprep.subr.mxu0 %v1210
        %1254 = vmatpush1.msra.mxu0 %v1209
        %1255 = vmatprep.subr.mxu0 %v1212
        %1256 = vmatpush1.msra.mxu0 %v1211
        %1257 = vmatprep.subr.mxu0 %v1214
        %1258 = vmatpush1.msra.mxu0 %v1213
        %1259 = vmatprep.subr.mxu0 %v1216
        %1260 = vmatpush1.msra.mxu0 %v1215
        %1261 = vmatprep.subr.mxu0 %v1218
        %1262 = vmatpush1.msra.mxu0 %v1217
        %1263 = vmatprep.subr.mxu0 %v1220
        %1264 = vmatpush1.msra.mxu0 %v1219
        %1265 = vmatprep.subr.mxu0 %v1222
        %1266 = vmatpush1.msra.mxu0 %v1221
        %1267 = vmatprep.subr.mxu0 %v1224
        %1268 = vmatpush1.msra.mxu0 %v1223
        %1269 = vmatprep.subr.mxu0 0.0
        %1270 = vmatpush1.msra.mxu0 0.0
        %1271 = vmatprep.subr.mxu0 0.0
        %1272 = vmatpush1.msra.mxu0 0.0
        %1273 = vmatprep.subr.mxu0 0.0
        %1274 = vmatpush1.msra.mxu0 0.0
        %1275 = vmatprep.subr.mxu0 0.0
        %1276 = vmatpush1.msra.mxu0 0.0
        %1277 = vmatprep.subr.mxu0 0.0
        %1278 = vmatpush1.msra.mxu0 0.0
        %1279 = vmatprep.subr.mxu0 0.0
        %1280 = vmatpush1.msra.mxu0 0.0
        %1281 = vmatprep.subr.mxu0 0.0
        %1282 = vmatpush1.msra.mxu0 0.0
        %1283 = vmatprep.subr.mxu0 0.0
        %1284 = vmatpush1.msra.mxu0 0.0
        %1285 = vmatprep.subr.mxu0 0.0
        %1286 = vmatpush1.msra.mxu0 0.0
        %1287 = vmatprep.subr.mxu0 0.0
        %1288 = vmatpush1.msra.mxu0 0.0
        %1289 = vmatprep.subr.mxu0 0.0
        %1290 = vmatpush1.msra.mxu0 0.0
        %1291 = vmatprep.subr.mxu0 0.0
        %1292 = vmatpush1.msra.mxu0 0.0
        %1293 = vmatprep.mubr.f32.mxu0 %v1227
        %1294 = vmatmul.mubr.f32.gmra.mrb[0].mxu0 %v1180
        %v1295 = vpop.f32.mrb[0].mxu0
        %v1296 = vadd.f32 0.0, %v1295
        %v1297 = vpop.f32.mrb[0].mxu0
        %v1298 = vadd.f32 0.0, %v1297
        %1299 = vdwg.mxu0
        %v1301 = vlaneseq
        %v1302 = vshrl.u32 %v1301, 7
        %v1303 = vsub.s32 0, %v1302
        %v1304 = vrot.slane %v1184, %v1303
        %v1305 = vlaneseq
        %v1306 = vshrl.u32 %v1305, 7
        %v1307 = vsub.s32 1, %v1306
        %v1308 = vrot.slane %v1184, %v1307
        %v1311 = vadd.f32 %v1304, %v1296
        %v1312 = vadd.f32 %v1308, %v1298
        %s1313 = scalar_lea.vmem [#allocation6], 320
        %v1314 = vld [vmem:[%s1313] sm:$0xff]
        %v1315 = vld [vmem:[%s1313 + $0x8] sm:$0xff]
        %v1316 = vld [vmem:[%s1313 + $0x10] sm:$0xff]
        %v1317 = vld [vmem:[%s1313 + $0x18] sm:$0xff]
        %v1318 = vld [vmem:[%s1313 + $0x20] sm:$0xff]
        %v1319 = vld [vmem:[%s1313 + $0x28] sm:$0xff]
        %v1320 = vld [vmem:[%s1313 + $0x30] sm:$0xff]
        %v1321 = vld [vmem:[%s1313 + $0x38] sm:$0xff]
        %v1322 = vld [vmem:[%s1313 + $0x40] sm:$0xff]
        %v1323 = vld [vmem:[%s1313 + $0x48] sm:$0xff]
        %v1324 = vld [vmem:[%s1313 + $0x50] sm:$0xff]
        %v1325 = vld [vmem:[%s1313 + $0x58] sm:$0xff]
        %v1326 = vld [vmem:[%s1313 + $0x60] sm:$0xff]
        %v1327 = vld [vmem:[%s1313 + $0x68] sm:$0xff]
        %v1328 = vld [vmem:[%s1313 + $0x70] sm:$0xff]
        %v1329 = vld [vmem:[%s1313 + $0x78] sm:$0xff]
        %v1330 = vld [vmem:[%s1313 + $0x80] sm:$0xff]
        %v1331 = vld [vmem:[%s1313 + $0x88] sm:$0xff]
        %v1332 = vld [vmem:[%s1313 + $0x90] sm:$0xff]
        %v1333 = vld [vmem:[%s1313 + $0x98] sm:$0xff]
        %v1334 = vld [vmem:[%s1313 + $0xa0] sm:$0xff]
        %v1335 = vld [vmem:[%s1313 + $0xa8] sm:$0xff]
        %v1336 = vld [vmem:[%s1313 + $0xb0] sm:$0xff]
        %v1337 = vld [vmem:[%s1313 + $0xb8] sm:$0xff]
        %v1338 = vld [vmem:[%s1313 + $0xc0] sm:$0xff]
        %v1339 = vld [vmem:[%s1313 + $0xc8] sm:$0xff]
        %v1340 = vld [vmem:[%s1313 + $0xd0] sm:$0xff]
        %v1341 = vld [vmem:[%s1313 + $0xd8] sm:$0xff]
        %v1342 = vld [vmem:[%s1313 + $0xe0] sm:$0xff]
        %v1343 = vld [vmem:[%s1313 + $0xe8] sm:$0xff]
        %v1344 = vld [vmem:[%s1313 + $0xf0] sm:$0xff]
        %v1345 = vld [vmem:[%s1313 + $0xf8] sm:$0xff]
        %v1346 = vld [vmem:[%s1313 + $0x100] sm:$0xff]
        %v1347 = vld [vmem:[%s1313 + $0x108] sm:$0xff]
        %v1348 = vld [vmem:[%s1313 + $0x110] sm:$0xff]
        %v1349 = vld [vmem:[%s1313 + $0x118] sm:$0xff]
        %v1350 = vld [vmem:[%s1313 + $0x120] sm:$0xff]
        %v1351 = vld [vmem:[%s1313 + $0x128] sm:$0xff]
        %v1352 = vld [vmem:[%s1313 + $0x130] sm:$0xff]
        %v1353 = vld [vmem:[%s1313 + $0x138] sm:$0xff]
        %v1357 = vrot.slane %v1180, 1
        %v1358 = vrot.slane %v1182, 1
        %v1359 = vsel %vm516, %v1357, %v1358
        %v1360 = vrot.slane %v1181, 1
        %v1361 = vrot.slane %v1183, 1
        %v1362 = vsel %vm516, %v1360, %v1361
        %v1364 = vsel %vm1225, %v1362, 0
        %1366 = vmatprep.subr.mxu0 %v1315
        %1367 = vmatpush1.msra.mxu0 %v1314
        %1368 = vmatprep.subr.mxu0 %v1317
        %1369 = vmatpush1.msra.mxu0 %v1316
        %1370 = vmatprep.subr.mxu0 %v1319
        %1371 = vmatpush1.msra.mxu0 %v1318
        %1372 = vmatprep.subr.mxu0 %v1321
        %1373 = vmatpush1.msra.mxu0 %v1320
        %1374 = vmatprep.subr.mxu0 %v1323
        %1375 = vmatpush1.msra.mxu0 %v1322
        %1376 = vmatprep.subr.mxu0 %v1325
        %1377 = vmatpush1.msra.mxu0 %v1324
        %1378 = vmatprep.subr.mxu0 %v1327
        %1379 = vmatpush1.msra.mxu0 %v1326
        %1380 = vmatprep.subr.mxu0 %v1329
        %1381 = vmatpush1.msra.mxu0 %v1328
        %1382 = vmatprep.subr.mxu0 %v1331
        %1383 = vmatpush1.msra.mxu0 %v1330
        %1384 = vmatprep.subr.mxu0 %v1333
        %1385 = vmatpush1.msra.mxu0 %v1332
        %1386 = vmatprep.subr.mxu0 %v1335
        %1387 = vmatpush1.msra.mxu0 %v1334
        %1388 = vmatprep.subr.mxu0 %v1337
        %1389 = vmatpush1.msra.mxu0 %v1336
        %1390 = vmatprep.subr.mxu0 %v1339
        %1391 = vmatpush1.msra.mxu0 %v1338
        %1392 = vmatprep.subr.mxu0 %v1341
        %1393 = vmatpush1.msra.mxu0 %v1340
        %1394 = vmatprep.subr.mxu0 %v1343
        %1395 = vmatpush1.msra.mxu0 %v1342
        %1396 = vmatprep.subr.mxu0 %v1345
        %1397 = vmatpush1.msra.mxu0 %v1344
        %1398 = vmatprep.subr.mxu0 %v1347
        %1399 = vmatpush1.msra.mxu0 %v1346
        %1400 = vmatprep.subr.mxu0 %v1349
        %1401 = vmatpush1.msra.mxu0 %v1348
        %1402 = vmatprep.subr.mxu0 %v1351
        %1403 = vmatpush1.msra.mxu0 %v1350
        %1404 = vmatprep.subr.mxu0 %v1353
        %1405 = vmatpush1.msra.mxu0 %v1352
        %1406 = vmatprep.subr.mxu0 0.0
        %1407 = vmatpush1.msra.mxu0 0.0
        %1408 = vmatprep.subr.mxu0 0.0
        %1409 = vmatpush1.msra.mxu0 0.0
        %1410 = vmatprep.subr.mxu0 0.0
        %1411 = vmatpush1.msra.mxu0 0.0
        %1412 = vmatprep.subr.mxu0 0.0
        %1413 = vmatpush1.msra.mxu0 0.0
        %1414 = vmatprep.subr.mxu0 0.0
        %1415 = vmatpush1.msra.mxu0 0.0
        %1416 = vmatprep.subr.mxu0 0.0
        %1417 = vmatpush1.msra.mxu0 0.0
        %1418 = vmatprep.subr.mxu0 0.0
        %1419 = vmatpush1.msra.mxu0 0.0
        %1420 = vmatprep.subr.mxu0 0.0
        %1421 = vmatpush1.msra.mxu0 0.0
        %1422 = vmatprep.subr.mxu0 0.0
        %1423 = vmatpush1.msra.mxu0 0.0
        %1424 = vmatprep.subr.mxu0 0.0
        %1425 = vmatpush1.msra.mxu0 0.0
        %1426 = vmatprep.subr.mxu0 0.0
        %1427 = vmatpush1.msra.mxu0 0.0
        %1428 = vmatprep.subr.mxu0 0.0
        %1429 = vmatpush1.msra.mxu0 0.0
        %1430 = vmatprep.mubr.f32.mxu0 %v1364
        %1431 = vmatmul.mubr.f32.gmra.mrb[0].mxu0 %v1359
        %v1432 = vpop.f32.mrb[0].mxu0
        %v1433 = vadd.f32 0.0, %v1432
        %v1434 = vpop.f32.mrb[0].mxu0
        %v1435 = vadd.f32 0.0, %v1434
        %1436 = vdwg.mxu0
        %v1437 = vadd.f32 %v1311, %v1433
        %v1438 = vadd.f32 %v1312, %v1435
        %s1439 = scalar_lea.vmem [#allocation6], 640
        %v1440 = vld [vmem:[%s1439] sm:$0xff]
        %v1441 = vld [vmem:[%s1439 + $0x8] sm:$0xff]
        %v1442 = vld [vmem:[%s1439 + $0x10] sm:$0xff]
        %v1443 = vld [vmem:[%s1439 + $0x18] sm:$0xff]
        %v1444 = vld [vmem:[%s1439 + $0x20] sm:$0xff]
        %v1445 = vld [vmem:[%s1439 + $0x28] sm:$0xff]
        %v1446 = vld [vmem:[%s1439 + $0x30] sm:$0xff]
        %v1447 = vld [vmem:[%s1439 + $0x38] sm:$0xff]
        %v1448 = vld [vmem:[%s1439 + $0x40] sm:$0xff]
        %v1449 = vld [vmem:[%s1439 + $0x48] sm:$0xff]
        %v1450 = vld [vmem:[%s1439 + $0x50] sm:$0xff]
        %v1451 = vld [vmem:[%s1439 + $0x58] sm:$0xff]
        %v1452 = vld [vmem:[%s1439 + $0x60] sm:$0xff]
        %v1453 = vld [vmem:[%s1439 + $0x68] sm:$0xff]
        %v1454 = vld [vmem:[%s1439 + $0x70] sm:$0xff]
        %v1455 = vld [vmem:[%s1439 + $0x78] sm:$0xff]
        %v1456 = vld [vmem:[%s1439 + $0x80] sm:$0xff]
        %v1457 = vld [vmem:[%s1439 + $0x88] sm:$0xff]
        %v1458 = vld [vmem:[%s1439 + $0x90] sm:$0xff]
        %v1459 = vld [vmem:[%s1439 + $0x98] sm:$0xff]
        %v1460 = vld [vmem:[%s1439 + $0xa0] sm:$0xff]
        %v1461 = vld [vmem:[%s1439 + $0xa8] sm:$0xff]
        %v1462 = vld [vmem:[%s1439 + $0xb0] sm:$0xff]
        %v1463 = vld [vmem:[%s1439 + $0xb8] sm:$0xff]
        %v1464 = vld [vmem:[%s1439 + $0xc0] sm:$0xff]
        %v1465 = vld [vmem:[%s1439 + $0xc8] sm:$0xff]
        %v1466 = vld [vmem:[%s1439 + $0xd0] sm:$0xff]
        %v1467 = vld [vmem:[%s1439 + $0xd8] sm:$0xff]
        %v1468 = vld [vmem:[%s1439 + $0xe0] sm:$0xff]
        %v1469 = vld [vmem:[%s1439 + $0xe8] sm:$0xff]
        %v1470 = vld [vmem:[%s1439 + $0xf0] sm:$0xff]
        %v1471 = vld [vmem:[%s1439 + $0xf8] sm:$0xff]
        %v1472 = vld [vmem:[%s1439 + $0x100] sm:$0xff]
        %v1473 = vld [vmem:[%s1439 + $0x108] sm:$0xff]
        %v1474 = vld [vmem:[%s1439 + $0x110] sm:$0xff]
        %v1475 = vld [vmem:[%s1439 + $0x118] sm:$0xff]
        %v1476 = vld [vmem:[%s1439 + $0x120] sm:$0xff]
        %v1477 = vld [vmem:[%s1439 + $0x128] sm:$0xff]
        %v1478 = vld [vmem:[%s1439 + $0x130] sm:$0xff]
        %v1479 = vld [vmem:[%s1439 + $0x138] sm:$0xff]
        %v1480 = vrot.slane %v1180, 2
        %v1481 = vrot.slane %v1182, 2
        %v1482 = vsel %vm626, %v1480, %v1481
        %v1483 = vrot.slane %v1181, 2
        %v1484 = vrot.slane %v1183, 2
        %v1485 = vsel %vm626, %v1483, %v1484
        %v1487 = vsel %vm1225, %v1485, 0
        %1489 = vmatprep.subr.mxu0 %v1441
        %1490 = vmatpush1.msra.mxu0 %v1440
        %1491 = vmatprep.subr.mxu0 %v1443
        %1492 = vmatpush1.msra.mxu0 %v1442
        %1493 = vmatprep.subr.mxu0 %v1445
        %1494 = vmatpush1.msra.mxu0 %v1444
        %1495 = vmatprep.subr.mxu0 %v1447
        %1496 = vmatpush1.msra.mxu0 %v1446
        %1497 = vmatprep.subr.mxu0 %v1449
        %1498 = vmatpush1.msra.mxu0 %v1448
        %1499 = vmatprep.subr.mxu0 %v1451
        %1500 = vmatpush1.msra.mxu0 %v1450
        %1501 = vmatprep.subr.mxu0 %v1453
        %1502 = vmatpush1.msra.mxu0 %v1452
        %1503 = vmatprep.subr.mxu0 %v1455
        %1504 = vmatpush1.msra.mxu0 %v1454
        %1505 = vmatprep.subr.mxu0 %v1457
        %1506 = vmatpush1.msra.mxu0 %v1456
        %1507 = vmatprep.subr.mxu0 %v1459
        %1508 = vmatpush1.msra.mxu0 %v1458
        %1509 = vmatprep.subr.mxu0 %v1461
        %1510 = vmatpush1.msra.mxu0 %v1460
        %1511 = vmatprep.subr.mxu0 %v1463
        %1512 = vmatpush1.msra.mxu0 %v1462
        %1513 = vmatprep.subr.mxu0 %v1465
        %1514 = vmatpush1.msra.mxu0 %v1464
        %1515 = vmatprep.subr.mxu0 %v1467
        %1516 = vmatpush1.msra.mxu0 %v1466
        %1517 = vmatprep.subr.mxu0 %v1469
        %1518 = vmatpush1.msra.mxu0 %v1468
        %1519 = vmatprep.subr.mxu0 %v1471
        %1520 = vmatpush1.msra.mxu0 %v1470
        %1521 = vmatprep.subr.mxu0 %v1473
        %1522 = vmatpush1.msra.mxu0 %v1472
        %1523 = vmatprep.subr.mxu0 %v1475
        %1524 = vmatpush1.msra.mxu0 %v1474
        %1525 = vmatprep.subr.mxu0 %v1477
        %1526 = vmatpush1.msra.mxu0 %v1476
        %1527 = vmatprep.subr.mxu0 %v1479
        %1528 = vmatpush1.msra.mxu0 %v1478
        %1529 = vmatprep.subr.mxu0 0.0
        %1530 = vmatpush1.msra.mxu0 0.0
        %1531 = vmatprep.subr.mxu0 0.0
        %1532 = vmatpush1.msra.mxu0 0.0
        %1533 = vmatprep.subr.mxu0 0.0
        %1534 = vmatpush1.msra.mxu0 0.0
        %1535 = vmatprep.subr.mxu0 0.0
        %1536 = vmatpush1.msra.mxu0 0.0
        %1537 = vmatprep.subr.mxu0 0.0
        %1538 = vmatpush1.msra.mxu0 0.0
        %1539 = vmatprep.subr.mxu0 0.0
        %1540 = vmatpush1.msra.mxu0 0.0
        %1541 = vmatprep.subr.mxu0 0.0
        %1542 = vmatpush1.msra.mxu0 0.0
        %1543 = vmatprep.subr.mxu0 0.0
        %1544 = vmatpush1.msra.mxu0 0.0
        %1545 = vmatprep.subr.mxu0 0.0
        %1546 = vmatpush1.msra.mxu0 0.0
        %1547 = vmatprep.subr.mxu0 0.0
        %1548 = vmatpush1.msra.mxu0 0.0
        %1549 = vmatprep.subr.mxu0 0.0
        %1550 = vmatpush1.msra.mxu0 0.0
        %1551 = vmatprep.subr.mxu0 0.0
        %1552 = vmatpush1.msra.mxu0 0.0
        %1553 = vmatprep.mubr.f32.mxu0 %v1487
        %1554 = vmatmul.mubr.f32.gmra.mrb[0].mxu0 %v1482
        %v1555 = vpop.f32.mrb[0].mxu0
        %v1556 = vadd.f32 0.0, %v1555
        %v1557 = vpop.f32.mrb[0].mxu0
        %v1558 = vadd.f32 0.0, %v1557
        %1559 = vdwg.mxu0
        %v1560 = vadd.f32 %v1437, %v1556
        %v1561 = vadd.f32 %v1438, %v1558
        %v1562 = vmax.f32 %v1560, 0.0
        %v1563 = vmax.f32 %v1561, 0.0
        %v1564 = vld [vmem:[%s7] sm:$0xff]
        %v1565 = vld [vmem:[%s7 + $0x8] sm:$0xff]
        %v1566 = vld [vmem:[%s7 + $0x10] sm:$0xff]
        %v1567 = vld [vmem:[%s7 + $0x18] sm:$0xff]
        %v1568 = vld [vmem:[%s7 + $0x20] sm:$0xff]
        %v1569 = vld [vmem:[%s7 + $0x28] sm:$0xff]
        %v1570 = vld [vmem:[%s7 + $0x30] sm:$0xff]
        %v1571 = vld [vmem:[%s7 + $0x38] sm:$0xff]
        %v1572 = vld [vmem:[%s7 + $0x40] sm:$0xff]
        %v1573 = vld [vmem:[%s7 + $0x48] sm:$0xff]
        %v1574 = vld [vmem:[%s7 + $0x50] sm:$0xff]
        %v1575 = vld [vmem:[%s7 + $0x58] sm:$0xff]
        %v1576 = vld [vmem:[%s7 + $0x60] sm:$0xff]
        %v1577 = vld [vmem:[%s7 + $0x68] sm:$0xff]
        %v1578 = vld [vmem:[%s7 + $0x70] sm:$0xff]
        %v1579 = vld [vmem:[%s7 + $0x78] sm:$0xff]
        %v1580 = vld [vmem:[%s7 + $0x80] sm:$0xff]
        %v1581 = vld [vmem:[%s7 + $0x88] sm:$0xff]
        %v1582 = vld [vmem:[%s7 + $0x90] sm:$0xff]
        %v1583 = vld [vmem:[%s7 + $0x98] sm:$0xff]
        %v1584 = vld [vmem:[%s7 + $0xa0] sm:$0xff]
        %v1585 = vld [vmem:[%s7 + $0xa8] sm:$0xff]
        %v1586 = vld [vmem:[%s7 + $0xb0] sm:$0xff]
        %v1587 = vld [vmem:[%s7 + $0xb8] sm:$0xff]
        %v1588 = vld [vmem:[%s7 + $0xc0] sm:$0xff]
        %v1589 = vld [vmem:[%s7 + $0xc8] sm:$0xff]
        %v1590 = vld [vmem:[%s7 + $0xd0] sm:$0xff]
        %v1591 = vld [vmem:[%s7 + $0xd8] sm:$0xff]
        %v1592 = vld [vmem:[%s7 + $0xe0] sm:$0xff]
        %v1593 = vld [vmem:[%s7 + $0xe8] sm:$0xff]
        %v1594 = vld [vmem:[%s7 + $0xf0] sm:$0xff]
        %v1595 = vld [vmem:[%s7 + $0xf8] sm:$0xff]
        %1596 = vmatprep.subr.mxu0 0.0
        %1597 = vmatpush1.msra.mxu0 %v1564
        %1598 = vmatprep.subr.mxu0 0.0
        %1599 = vmatpush1.msra.mxu0 %v1565
        %1600 = vmatprep.subr.mxu0 0.0
        %1601 = vmatpush1.msra.mxu0 %v1566
        %1602 = vmatprep.subr.mxu0 0.0
        %1603 = vmatpush1.msra.mxu0 %v1567
        %1604 = vmatprep.subr.mxu0 0.0
        %1605 = vmatpush1.msra.mxu0 %v1568
        %1606 = vmatprep.subr.mxu0 0.0
        %1607 = vmatpush1.msra.mxu0 %v1569
        %1608 = vmatprep.subr.mxu0 0.0
        %1609 = vmatpush1.msra.mxu0 %v1570
        %1610 = vmatprep.subr.mxu0 0.0
        %1611 = vmatpush1.msra.mxu0 %v1571
        %1612 = vmatprep.subr.mxu0 0.0
        %1613 = vmatpush1.msra.mxu0 %v1572
        %1614 = vmatprep.subr.mxu0 0.0
        %1615 = vmatpush1.msra.mxu0 %v1573
        %1616 = vmatprep.subr.mxu0 0.0
        %1617 = vmatpush1.msra.mxu0 %v1574
        %1618 = vmatprep.subr.mxu0 0.0
        %1619 = vmatpush1.msra.mxu0 %v1575
        %1620 = vmatprep.subr.mxu0 0.0
        %1621 = vmatpush1.msra.mxu0 %v1576
        %1622 = vmatprep.subr.mxu0 0.0
        %1623 = vmatpush1.msra.mxu0 %v1577
        %1624 = vmatprep.subr.mxu0 0.0
        %1625 = vmatpush1.msra.mxu0 %v1578
        %1626 = vmatprep.subr.mxu0 0.0
        %1627 = vmatpush1.msra.mxu0 %v1579
        %1628 = vmatprep.subr.mxu0 0.0
        %1629 = vmatpush1.msra.mxu0 %v1580
        %1630 = vmatprep.subr.mxu0 0.0
        %1631 = vmatpush1.msra.mxu0 %v1581
        %1632 = vmatprep.subr.mxu0 0.0
        %1633 = vmatpush1.msra.mxu0 %v1582
        %1634 = vmatprep.subr.mxu0 0.0
        %1635 = vmatpush1.msra.mxu0 %v1583
        %1636 = vmatprep.subr.mxu0 0.0
        %1637 = vmatpush1.msra.mxu0 %v1584
        %1638 = vmatprep.subr.mxu0 0.0
        %1639 = vmatpush1.msra.mxu0 %v1585
        %1640 = vmatprep.subr.mxu0 0.0
        %1641 = vmatpush1.msra.mxu0 %v1586
        %1642 = vmatprep.subr.mxu0 0.0
        %1643 = vmatpush1.msra.mxu0 %v1587
        %1644 = vmatprep.subr.mxu0 0.0
        %1645 = vmatpush1.msra.mxu0 %v1588
        %1646 = vmatprep.subr.mxu0 0.0
        %1647 = vmatpush1.msra.mxu0 %v1589
        %1648 = vmatprep.subr.mxu0 0.0
        %1649 = vmatpush1.msra.mxu0 %v1590
        %1650 = vmatprep.subr.mxu0 0.0
        %1651 = vmatpush1.msra.mxu0 %v1591
        %1652 = vmatprep.subr.mxu0 0.0
        %1653 = vmatpush1.msra.mxu0 %v1592
        %1654 = vmatprep.subr.mxu0 0.0
        %1655 = vmatpush1.msra.mxu0 %v1593
        %1656 = vmatprep.subr.mxu0 0.0
        %1657 = vmatpush1.msra.mxu0 %v1594
        %1658 = vmatprep.subr.mxu0 0.0
        %1659 = vmatpush1.msra.mxu0 %v1595
        %1660 = vmatprep.mubr.f32.mxu0 %v1563
        %1661 = vmatmul.mubr.f32.gmra.mrb[0].mxu0 %v1562
        %v1662 = vpop.f32.mrb[0].mxu0
        %v1663 = vadd.f32 0.0, %v1662
        %v1664 = vpop.f32.mrb[0].mxu0
        %1665 = vdwg.mxu0
        %s1666 = scalar_lea.vmem %s7, 256
        %v1667 = vld [vmem:[%s1666] sm:$0xff]
        %v1668 = vld [vmem:[%s1666 + $0x8] sm:$0xff]
        %v1669 = vld [vmem:[%s1666 + $0x10] sm:$0xff]
        %v1670 = vld [vmem:[%s1666 + $0x18] sm:$0xff]
        %v1671 = vld [vmem:[%s1666 + $0x20] sm:$0xff]
        %v1672 = vld [vmem:[%s1666 + $0x28] sm:$0xff]
        %v1673 = vld [vmem:[%s1666 + $0x30] sm:$0xff]
        %v1674 = vld [vmem:[%s1666 + $0x38] sm:$0xff]
        %v1675 = vld [vmem:[%s1666 + $0x40] sm:$0xff]
        %v1676 = vld [vmem:[%s1666 + $0x48] sm:$0xff]
        %v1677 = vld [vmem:[%s1666 + $0x50] sm:$0xff]
        %v1678 = vld [vmem:[%s1666 + $0x58] sm:$0xff]
        %v1679 = vld [vmem:[%s1666 + $0x60] sm:$0xff]
        %v1680 = vld [vmem:[%s1666 + $0x68] sm:$0xff]
        %v1681 = vld [vmem:[%s1666 + $0x70] sm:$0xff]
        %v1682 = vld [vmem:[%s1666 + $0x78] sm:$0xff]
        %v1683 = vld [vmem:[%s1666 + $0x80] sm:$0xff]
        %v1684 = vld [vmem:[%s1666 + $0x88] sm:$0xff]
        %v1685 = vld [vmem:[%s1666 + $0x90] sm:$0xff]
        %v1686 = vld [vmem:[%s1666 + $0x98] sm:$0xff]
        %v1687 = vld [vmem:[%s1666 + $0xa0] sm:$0xff]
        %v1688 = vld [vmem:[%s1666 + $0xa8] sm:$0xff]
        %v1689 = vld [vmem:[%s1666 + $0xb0] sm:$0xff]
        %v1690 = vld [vmem:[%s1666 + $0xb8] sm:$0xff]
        %v1691 = vld [vmem:[%s1666 + $0xc0] sm:$0xff]
        %v1692 = vld [vmem:[%s1666 + $0xc8] sm:$0xff]
        %v1693 = vld [vmem:[%s1666 + $0xd0] sm:$0xff]
        %v1694 = vld [vmem:[%s1666 + $0xd8] sm:$0xff]
        %v1695 = vld [vmem:[%s1666 + $0xe0] sm:$0xff]
        %v1696 = vld [vmem:[%s1666 + $0xe8] sm:$0xff]
        %v1697 = vld [vmem:[%s1666 + $0xf0] sm:$0xff]
        %v1698 = vld [vmem:[%s1666 + $0xf8] sm:$0xff]
        %1699 = vmatprep.subr.mxu0 0.0
        %1700 = vmatpush1.msra.mxu0 %v1667
        %1701 = vmatprep.subr.mxu0 0.0
        %1702 = vmatpush1.msra.mxu0 %v1668
        %1703 = vmatprep.subr.mxu0 0.0
        %1704 = vmatpush1.msra.mxu0 %v1669
        %1705 = vmatprep.subr.mxu0 0.0
        %1706 = vmatpush1.msra.mxu0 %v1670
        %1707 = vmatprep.subr.mxu0 0.0
        %1708 = vmatpush1.msra.mxu0 %v1671
        %1709 = vmatprep.subr.mxu0 0.0
        %1710 = vmatpush1.msra.mxu0 %v1672
        %1711 = vmatprep.subr.mxu0 0.0
        %1712 = vmatpush1.msra.mxu0 %v1673
        %1713 = vmatprep.subr.mxu0 0.0
        %1714 = vmatpush1.msra.mxu0 %v1674
        %1715 = vmatprep.subr.mxu0 0.0
        %1716 = vmatpush1.msra.mxu0 %v1675
        %1717 = vmatprep.subr.mxu0 0.0
        %1718 = vmatpush1.msra.mxu0 %v1676
        %1719 = vmatprep.subr.mxu0 0.0
        %1720 = vmatpush1.msra.mxu0 %v1677
        %1721 = vmatprep.subr.mxu0 0.0
        %1722 = vmatpush1.msra.mxu0 %v1678
        %1723 = vmatprep.subr.mxu0 0.0
        %1724 = vmatpush1.msra.mxu0 %v1679
        %1725 = vmatprep.subr.mxu0 0.0
        %1726 = vmatpush1.msra.mxu0 %v1680
        %1727 = vmatprep.subr.mxu0 0.0
        %1728 = vmatpush1.msra.mxu0 %v1681
        %1729 = vmatprep.subr.mxu0 0.0
        %1730 = vmatpush1.msra.mxu0 %v1682
        %1731 = vmatprep.subr.mxu0 0.0
        %1732 = vmatpush1.msra.mxu0 %v1683
        %1733 = vmatprep.subr.mxu0 0.0
        %1734 = vmatpush1.msra.mxu0 %v1684
        %1735 = vmatprep.subr.mxu0 0.0
        %1736 = vmatpush1.msra.mxu0 %v1685
        %1737 = vmatprep.subr.mxu0 0.0
        %1738 = vmatpush1.msra.mxu0 %v1686
        %1739 = vmatprep.subr.mxu0 0.0
        %1740 = vmatpush1.msra.mxu0 %v1687
        %1741 = vmatprep.subr.mxu0 0.0
        %1742 = vmatpush1.msra.mxu0 %v1688
        %1743 = vmatprep.subr.mxu0 0.0
        %1744 = vmatpush1.msra.mxu0 %v1689
        %1745 = vmatprep.subr.mxu0 0.0
        %1746 = vmatpush1.msra.mxu0 %v1690
        %1747 = vmatprep.subr.mxu0 0.0
        %1748 = vmatpush1.msra.mxu0 %v1691
        %1749 = vmatprep.subr.mxu0 0.0
        %1750 = vmatpush1.msra.mxu0 %v1692
        %1751 = vmatprep.subr.mxu0 0.0
        %1752 = vmatpush1.msra.mxu0 %v1693
        %1753 = vmatprep.subr.mxu0 0.0
        %1754 = vmatpush1.msra.mxu0 %v1694
        %1755 = vmatprep.subr.mxu0 0.0
        %1756 = vmatpush1.msra.mxu0 %v1695
        %1757 = vmatprep.subr.mxu0 0.0
        %1758 = vmatpush1.msra.mxu0 %v1696
        %1759 = vmatprep.subr.mxu0 0.0
        %1760 = vmatpush1.msra.mxu0 %v1697
        %1761 = vmatprep.subr.mxu0 0.0
        %1762 = vmatpush1.msra.mxu0 %v1698
        %1763 = vmatprep.mubr.f32.mxu0 %v1563
        %1764 = vmatmul.mubr.f32.gmra.mrb[0].mxu0 %v1562
        %v1765 = vpop.f32.mrb[0].mxu0
        %v1766 = vadd.f32 0.0, %v1765
        %v1767 = vpop.f32.mrb[0].mxu0
        %1768 = vdwg.mxu0
        %v1769 = vmax.f32 %v1663, %v1766
        %v1770 = vld [vmem:[%s8] sm:$0xf]
        %vm1771 = vcmask 64512
        %v1773 = vsel %vm1771, %v1770, 0
        %1775 = vmatprep.subr.mxu0 0.0
        %1776 = vmatpush1.msra.mxu0 %v1769
        %1777 = vmatprep.subr.mxu0 0.0
        %1778 = vmatpush1.msra.mxu0 0.0
        %1779 = vmatprep.subr.mxu0 0.0
        %1780 = vmatpush1.msra.mxu0 0.0
        %1781 = vmatprep.subr.mxu0 0.0
        %1782 = vmatpush1.msra.mxu0 0.0
        %1783 = vmatprep.subr.mxu0 0.0
        %1784 = vmatpush1.msra.mxu0 0.0
        %1785 = vmatprep.subr.mxu0 0.0
        %1786 = vmatpush1.msra.mxu0 0.0
        %1787 = vmatprep.subr.mxu0 0.0
        %1788 = vmatpush1.msra.mxu0 0.0
        %1789 = vmatprep.subr.mxu0 0.0
        %1790 = vmatpush1.msra.mxu0 0.0
        %1791 = vmatprep.subr.mxu0 0.0
        %1792 = vmatpush1.msra.mxu0 0.0
        %1793 = vmatprep.subr.mxu0 0.0
        %1794 = vmatpush1.msra.mxu0 0.0
        %1795 = vmatprep.subr.mxu0 0.0
        %1796 = vmatpush1.msra.mxu0 0.0
        %1797 = vmatprep.subr.mxu0 0.0
        %1798 = vmatpush1.msra.mxu0 0.0
        %1799 = vmatprep.subr.mxu0 0.0
        %1800 = vmatpush1.msra.mxu0 0.0
        %1801 = vmatprep.subr.mxu0 0.0
        %1802 = vmatpush1.msra.mxu0 0.0
        %1803 = vmatprep.subr.mxu0 0.0
        %1804 = vmatpush1.msra.mxu0 0.0
        %1805 = vmatprep.subr.mxu0 0.0
        %1806 = vmatpush1.msra.mxu0 0.0
        %1807 = vmatprep.subr.mxu0 0.0
        %1808 = vmatpush1.msra.mxu0 0.0
        %1809 = vmatprep.subr.mxu0 0.0
        %1810 = vmatpush1.msra.mxu0 0.0
        %1811 = vmatprep.subr.mxu0 0.0
        %1812 = vmatpush1.msra.mxu0 0.0
        %1813 = vmatprep.subr.mxu0 0.0
        %1814 = vmatpush1.msra.mxu0 0.0
        %1815 = vmatprep.subr.mxu0 0.0
        %1816 = vmatpush1.msra.mxu0 0.0
        %1817 = vmatprep.subr.mxu0 0.0
        %1818 = vmatpush1.msra.mxu0 0.0
        %1819 = vmatprep.subr.mxu0 0.0
        %1820 = vmatpush1.msra.mxu0 0.0
        %1821 = vmatprep.subr.mxu0 0.0
        %1822 = vmatpush1.msra.mxu0 0.0
        %1823 = vmatprep.subr.mxu0 0.0
        %1824 = vmatpush1.msra.mxu0 0.0
        %1825 = vmatprep.subr.mxu0 0.0
        %1826 = vmatpush1.msra.mxu0 0.0
        %1827 = vmatprep.subr.mxu0 0.0
        %1828 = vmatpush1.msra.mxu0 0.0
        %1829 = vmatprep.subr.mxu0 0.0
        %1830 = vmatpush1.msra.mxu0 0.0
        %1831 = vmatprep.subr.mxu0 0.0
        %1832 = vmatpush1.msra.mxu0 0.0
        %1833 = vmatprep.subr.mxu0 0.0
        %1834 = vmatpush1.msra.mxu0 0.0
        %1835 = vmatprep.subr.mxu0 0.0
        %1836 = vmatpush1.msra.mxu0 0.0
        %1837 = vmatprep.subr.mxu0 0.0
        %1838 = vmatpush1.msra.mxu0 0.0
        %1839 = vmatprep.mubr.f32.mxu0 0.0
        %1840 = vmatmul.mubr.f32.gmra.mrb[0].mxu0 %v1773
        %v1841 = vpop.f32.mrb[0].mxu0
        %v1842 = vadd.f32 0.0, %v1841
        %v1843 = vpop.f32.mrb[0].mxu0
        %1844 = vdwg.mxu0
        %s1845 = scalar_lea.vmem %s8, 4
        %v1846 = vld [vmem:[%s1845] sm:$0xf]
        %v1848 = vsel %vm1771, %v1846, 0
        %1850 = vmatprep.subr.mxu0 0.0
        %1851 = vmatpush1.msra.mxu0 %v1769
        %1852 = vmatprep.subr.mxu0 0.0
        %1853 = vmatpush1.msra.mxu0 0.0
        %1854 = vmatprep.subr.mxu0 0.0
        %1855 = vmatpush1.msra.mxu0 0.0
        %1856 = vmatprep.subr.mxu0 0.0
        %1857 = vmatpush1.msra.mxu0 0.0
        %1858 = vmatprep.subr.mxu0 0.0
        %1859 = vmatpush1.msra.mxu0 0.0
        %1860 = vmatprep.subr.mxu0 0.0
        %1861 = vmatpush1.msra.mxu0 0.0
        %1862 = vmatprep.subr.mxu0 0.0
        %1863 = vmatpush1.msra.mxu0 0.0
        %1864 = vmatprep.subr.mxu0 0.0
        %1865 = vmatpush1.msra.mxu0 0.0
        %1866 = vmatprep.subr.mxu0 0.0
        %1867 = vmatpush1.msra.mxu0 0.0
        %1868 = vmatprep.subr.mxu0 0.0
        %1869 = vmatpush1.msra.mxu0 0.0
        %1870 = vmatprep.subr.mxu0 0.0
        %1871 = vmatpush1.msra.mxu0 0.0
        %1872 = vmatprep.subr.mxu0 0.0
        %1873 = vmatpush1.msra.mxu0 0.0
        %1874 = vmatprep.subr.mxu0 0.0
        %1875 = vmatpush1.msra.mxu0 0.0
        %1876 = vmatprep.subr.mxu0 0.0
        %1877 = vmatpush1.msra.mxu0 0.0
        %1878 = vmatprep.subr.mxu0 0.0
        %1879 = vmatpush1.msra.mxu0 0.0
        %1880 = vmatprep.subr.mxu0 0.0
        %1881 = vmatpush1.msra.mxu0 0.0
        %1882 = vmatprep.subr.mxu0 0.0
        %1883 = vmatpush1.msra.mxu0 0.0
        %1884 = vmatprep.subr.mxu0 0.0
        %1885 = vmatpush1.msra.mxu0 0.0
        %1886 = vmatprep.subr.mxu0 0.0
        %1887 = vmatpush1.msra.mxu0 0.0
        %1888 = vmatprep.subr.mxu0 0.0
        %1889 = vmatpush1.msra.mxu0 0.0
        %1890 = vmatprep.subr.mxu0 0.0
        %1891 = vmatpush1.msra.mxu0 0.0
        %1892 = vmatprep.subr.mxu0 0.0
        %1893 = vmatpush1.msra.mxu0 0.0
        %1894 = vmatprep.subr.mxu0 0.0
        %1895 = vmatpush1.msra.mxu0 0.0
        %1896 = vmatprep.subr.mxu0 0.0
        %1897 = vmatpush1.msra.mxu0 0.0
        %1898 = vmatprep.subr.mxu0 0.0
        %1899 = vmatpush1.msra.mxu0 0.0
        %1900 = vmatprep.subr.mxu0 0.0
        %1901 = vmatpush1.msra.mxu0 0.0
        %1902 = vmatprep.subr.mxu0 0.0
        %1903 = vmatpush1.msra.mxu0 0.0
        %1904 = vmatprep.subr.mxu0 0.0
        %1905 = vmatpush1.msra.mxu0 0.0
        %1906 = vmatprep.subr.mxu0 0.0
        %1907 = vmatpush1.msra.mxu0 0.0
        %1908 = vmatprep.subr.mxu0 0.0
        %1909 = vmatpush1.msra.mxu0 0.0
        %1910 = vmatprep.subr.mxu0 0.0
        %1911 = vmatpush1.msra.mxu0 0.0
        %1912 = vmatprep.subr.mxu0 0.0
        %1913 = vmatpush1.msra.mxu0 0.0
        %1914 = vmatprep.mubr.f32.mxu0 0.0
        %1915 = vmatmul.mubr.f32.gmra.mrb[0].mxu0 %v1848
        %v1916 = vpop.f32.mrb[0].mxu0
        %v1917 = vadd.f32 0.0, %v1916
        %v1918 = vpop.f32.mrb[0].mxu0
        %1919 = vdwg.mxu0
        %v1920 = vmax.f32 %v1842, %v1917
        %1921 = vst [vmem:[%s374] sm:$0xf] %v1920
        %p1922 = scmp.lt.s32.totalorder %s22, 1
        %s1923 = scalar_select %p1922, %s22, 1
        %s1924 = smul.addr %s1923, 4
        %s1925 = scalar_lea.vmem %s9, %s1924
        // Predicated region
        $region69: #{alex_bottom_forward.1} parent=55 // pred_check
          %p1926 = pneg %p234
        $region70: #{alex_bottom_forward.1} parent=55 // pred_check_branch
          %1928 = sbr.rel (%p1926) target = $region72
        $region71: #{alex_bottom_forward.1} parent=55 // pred_region
          _
        $region72: #{alex_bottom_forward.1} parent=55 // pred_fallthru
          _
      $region56: #{alex_bottom_forward.1} parent=5 // pred_fallthru
        _
      %p1929 = scmp.le.s32.totalorder 2, %s17
      // Predicated region
      $region73: #{alex_bottom_forward.1} parent=5 // pred_check
        %p1930 = pneg %p1929
      $region74: #{alex_bottom_forward.1} parent=5 // pred_check_branch
        %1932 = sbr.rel (%p1930) target = $region76
      $region75: #{alex_bottom_forward.1} parent=5 // pred_region
        %s1933 = ssub.s32 %s17, 2
        // Predicated region
        $region77: #{alex_bottom_forward.1} parent=75 // pred_check
          %p1934 = pneg %p240
        $region78: #{alex_bottom_forward.1} parent=75 // pred_check_branch
          %1936 = sbr.rel (%p1934) target = $region80
        $region79: #{alex_bottom_forward.1} parent=75 // pred_region
          %p1937 = scmp.lt.s32.totalorder %s23, 1
          %s1938 = scalar_select %p1937, %s23, 1
          %s1939 = smul.addr %s1938, 4
          %s1940 = scalar_lea.vmem %s9, %s1939
        $region80: #{alex_bottom_forward.1} parent=75 // pred_fallthru
          _
      $region76: #{alex_bottom_forward.1} parent=5 // pred_fallthru
        _
    $region6: #{alex_bottom_forward.1} parent=1 // loop_footer
      %s21 = sadd.s32 1, %s17
    $region7: #{alex_bottom_forward.1} parent=1 // loop_footer_branch
      %16 = sbr.rel target = $region3
    $region8: #{alex_bottom_forward.1} parent=1 // loop_exit
      _
    %1941 = vsyncpa [#allocation3], 1
    %s1942 = scalar_lea.sflag [#allocation3], 1
    %1943 = vsyncpa %s1942, 1
    %1944 = vsyncpa [#allocation5], 1

</llo_original>
